<compile_context>
chip_gen: v7x
topology: tpu7x:2x2x1
jax: 0.10.0
libtpu: 0.0.40
codegen_flags: <defaults>
</compile_context>

<pallas_src>
import math
import numpy as np

import jax
import jax.numpy as jnp
from jax.experimental import pallas as pl
from jax.experimental.pallas import tpu as pltpu


# Taps of a k=3, stride=2, pad=1, output_pad=1 transposed conv, per output parity:
#   out[2R+qh, 2C+qw] += u[R+dr, C+dc] @ W[:, :, kh, kw]   (u zero-padded past its edge)
_TAPS = {
    (0, 0): [(0, 0, 1, 1)],
    (0, 1): [(0, 0, 1, 2), (0, 1, 1, 0)],
    (1, 0): [(0, 0, 2, 1), (1, 0, 0, 1)],
    (1, 1): [(0, 0, 2, 2), (0, 1, 2, 0), (1, 0, 0, 2), (1, 1, 0, 0)],
}


# ----------------------------- host-side packing -----------------------------

def _shift_mats(h, w):
    """(3, h*w, h*w) 0/1 matrices: right-multiplying by them shifts the flattened
    h x w lane grid by (c+1), (r+1), (r+1,c+1) with zero fill at the boundary."""
    n = h * w
    s = np.zeros((3, n, n), np.float32)
    for r in range(h):
        for c in range(w):
            l = r * w + c
            if c + 1 < w:
                s[0, l + 1, l] = 1.0
            if r + 1 < h:
                s[1, l + w, l] = 1.0
            if c + 1 < w and r + 1 < h:
                s[2, l + w + 1, l] = 1.0
    return s


def _pack_conv1(w):
    """ConvTranspose weight (Cin, Cout, 3, 3) -> (4*Cout, 4*Cin) parity/tap matrix.
    Output rows: parity(2*qh+qw)*Cout + cout; cols: shift(2*dr+dc)*Cin + cin."""
    cin, cout = w.shape[0], w.shape[1]
    out = np.zeros((4 * cout, 4 * cin), np.float32)
    for (qh, qw), taps in _TAPS.items():
        p = 2 * qh + qw
        for dr, dc, kh, kw in taps:
            s = 2 * dr + dc
            out[p * cout:(p + 1) * cout, s * cin:(s + 1) * cin] += w[:, :, kh, kw].T
    return out


def _pack_conv2(w):
    """ConvTranspose weight (Cin, 1, 3, 3) -> (16, 16*Cin) matrix acting directly
    on the parity-packed conv1 output (input rows: shift*4*Cin + conv1_parity*Cin + cin;
    output rows: ((a*2+b)*2+qh)*2+qw for conv1-parity (a,b) and conv2-parity (qh,qw))."""
    cin = w.shape[0]
    out = np.zeros((16, 16 * cin), np.float32)
    for a in (0, 1):
        for b in (0, 1):
            for (qh, qw), taps in _TAPS.items():
                g = ((a * 2 + b) * 2 + qh) * 2 + qw
                for dr, dc, kh, kw in taps:
                    a2, rs = (a + dr) % 2, (a + dr) // 2
                    b2, cs = (b + dc) % 2, (b + dc) // 2
                    s = 2 * rs + cs
                    p = 2 * a2 + b2
                    col = s * 4 * cin + p * cin
                    out[g, col:col + cin] += w[:, 0, kh, kw]
    return out


def pack_params(params):
    d = params["fc_w"].shape[1]
    fc_w = np.asarray(params["fc_w"], np.float32)                 # (1568, d), rows = cin*49 + rc
    wfc = np.ascontiguousarray(fc_w.reshape(32, 49, d).transpose(2, 0, 1))  # (d, 32, 49)
    bfc = np.asarray(params["fc_b"], np.float32).reshape(32, 49)
    w1 = _pack_conv1(np.asarray(params["ct1_w"], np.float32))     # (64, 128)
    b1 = np.tile(np.asarray(params["ct1_b"], np.float32), 4).reshape(64, 1)
    m2 = _pack_conv2(np.asarray(params["ct2_w"], np.float32))     # (16, 256)
    b2 = np.asarray(params["ct2_b"], np.float32).reshape(1, 1)
    s = _shift_mats(7, 7)                                         # (3, 49, 49)
    return {k: jnp.asarray(v) for k, v in
            dict(wfc=wfc, bfc=bfc, w1=w1, b1=b1, m2=m2, b2=b2, s=s).items()}


# --------------------------------- kernel ------------------------------------

def _decoder_kernel(x_ref, wfc_ref, bfc_ref, w1_ref, b1_ref, m2_ref, b2_ref,
                    s_ref, out_ref):
    n_batch, d = x_ref.shape
    sc, sr, srr = s_ref[0], s_ref[1], s_ref[2]      # (49, 49) shift matrices
    w1 = w1_ref[...]                                # (64, 128)
    b1 = b1_ref[...]                                # (64, 1)
    m2 = m2_ref[...]                                # (16, 256)
    b2 = b2_ref[...]                                # (1, 1)
    bfc = bfc_ref[...]                              # (32, 49)

    def taps(v):  # (C, 49) -> (4C, 49): [v, v@(c+1), v@(r+1), v@(r+1,c+1)]
        return jnp.concatenate(
            [v,
             jnp.dot(v, sc, preferred_element_type=jnp.float32),
             jnp.dot(v, sr, preferred_element_type=jnp.float32),
             jnp.dot(v, srr, preferred_element_type=jnp.float32)], axis=0)

    for n in range(n_batch):
        # fc: h[cin, r*7+c] -- NCHW-flat, so the Linear output needs no relayout.
        h = bfc
        for j in range(d):
            h = h + x_ref[n, j] * wfc_ref[j]        # scalar (SMEM) x (32, 49) FMA
        # conv1: all 4 output parities in ONE matmul (K=128), fused bias + ReLU
        y1 = jnp.dot(w1, taps(h), preferred_element_type=jnp.float32) + b1
        y1 = jnp.maximum(y1, 0.0)                   # (64, 49): rows = parity*16 + cout
        # conv2: all 16 output sub-grids in ONE matmul (K=256), fused bias + sigmoid
        y2 = jnp.dot(m2, taps(y1), preferred_element_type=jnp.float32) + b2
        out_ref[n] = jax.nn.sigmoid(y2)             # (16, 49)


# --------------------------------- wrapper ------------------------------------

def decoder_forward(x, packed):
    """x: (N, d) latent -> (N, 1, 28, 28), matching PyTorch Decoder_depth2."""
    n = x.shape[0]
    vmem = pl.BlockSpec(memory_space=pltpu.MemorySpace.VMEM)
    out_packed = pl.pallas_call(
        _decoder_kernel,
        out_shape=jax.ShapeDtypeStruct((n, 16, 49), jnp.float32),
        in_specs=[pl.BlockSpec(memory_space=pltpu.MemorySpace.SMEM),  # x: per-sample scalars
                  vmem, vmem, vmem, vmem, vmem, vmem, vmem],
        out_specs=vmem,
    )(x, packed["wfc"], packed["bfc"], packed["w1"], packed["b1"],
      packed["m2"], packed["b2"], packed["s"])
    # Unpack parity-packed output: axis1 = (a, b, qh, qw), axis2 = (r, c);
    # final pixel: OH = 4r + 2a + qh, OW = 4c + 2b + qw.
    o = out_packed.reshape(n, 2, 2, 2, 2, 7, 7)
    o = o.transpose(0, 5, 1, 3, 6, 2, 4)            # (n, r, a, qh, c, b, qw)
    return o.reshape(n, 1, 28, 28)


# --------------------------- pure-JAX reference -------------------------------

def _ct_ref(h_nchw, w_t, b):
    # transposed conv == lhs-dilated regular conv with the flipped/transposed kernel
    w_conv = jnp.transpose(w_t[:, :, ::-1, ::-1], (1, 0, 2, 3))  # OIHW
    out = jax.lax.conv_general_dilated(
        h_nchw, w_conv, window_strides=(1, 1),
        padding=((1, 2), (1, 2)), lhs_dilation=(2, 2),
        dimension_numbers=("NCHW", "OIHW", "NCHW"))
    return out + b.reshape(1, -1, 1, 1)


def decoder_reference(x, params):
    h = x @ params["fc_w"].T + params["fc_b"]
    h = h.reshape(-1, 32, 7, 7)
    h = jax.nn.relu(_ct_ref(h, params["ct1_w"], params["ct1_b"]))
    h = jax.nn.sigmoid(_ct_ref(h, params["ct2_w"], params["ct2_b"]))
    return h


# --------------------------------- main ---------------------------------------

def init_params(key, d):
    ks = jax.random.split(key, 6)

    def u(k, shape, fan_in):
        bound = 1.0 / math.sqrt(fan_in)
        return jax.random.uniform(k, shape, jnp.float32, -bound, bound)

    return {
        "fc_w": u(ks[0], (32 * 7 * 7, d), d),       # PyTorch Linear weight (out, in)
        "fc_b": u(ks[1], (32 * 7 * 7,), d),
        "ct1_w": u(ks[2], (32, 16, 3, 3), 16 * 9),  # ConvTranspose2d weight (Cin, Cout, kH, kW)
        "ct1_b": u(ks[3], (16,), 16 * 9),
        "ct2_w": u(ks[4], (16, 1, 3, 3), 1 * 9),
        "ct2_b": u(ks[5], (1,), 1 * 9),
    }


if __name__ == "__main__":
    d = 8
    N = 2
    key = jax.random.PRNGKey(0)
    kp, kx = jax.random.split(key)
    params = init_params(kp, d)
    packed = pack_params(params)
    x = jax.random.normal(kx, (N, d), jnp.float32)

    out = jax.jit(decoder_forward)(x, packed)
    out = jax.block_until_ready(out)
    assert out.shape == (N, 1, 28, 28), out.shape

    ref = decoder_reference(x, params)
    err = float(jnp.max(jnp.abs(out - ref)))
    assert err < 1e-4, err

    print("KERNEL_OK")
</pallas_src>

<mosaic_0001>
module attributes {stable_mosaic.version = 11 : i64} {
  func.func @_decoder_kernel(%arg0: memref<2x8xf32, #tpu.memory_space<smem>>, %arg1: memref<8x32x49xf32, #tpu.memory_space<vmem>>, %arg2: memref<32x49xf32, #tpu.memory_space<vmem>>, %arg3: memref<64x128xf32, #tpu.memory_space<vmem>>, %arg4: memref<64x1xf32, #tpu.memory_space<vmem>>, %arg5: memref<16x256xf32, #tpu.memory_space<vmem>>, %arg6: memref<1x1xf32, #tpu.memory_space<vmem>>, %arg7: memref<3x49x49xf32, #tpu.memory_space<vmem>>, %arg8: memref<2x16x49xf32, #tpu.memory_space<vmem>>) attributes {dimension_semantics = [], scalar_prefetch = 0 : i64, scratch_operands = 0 : i64, tpu.core_type = #tpu.core_type<tc>} {
    %c0 = arith.constant 0 : index
    %c0_0 = arith.constant 0 : index
    %c0_1 = arith.constant 0 : index
    %0 = vector.load %arg7[%c0, %c0_0, %c0_1] : memref<3x49x49xf32, #tpu.memory_space<vmem>>, vector<1x49x49xf32>
    %1 = vector.shape_cast %0 : vector<1x49x49xf32> to vector<49x49xf32>
    %c1 = arith.constant 1 : index
    %c0_2 = arith.constant 0 : index
    %c0_3 = arith.constant 0 : index
    %2 = vector.load %arg7[%c1, %c0_2, %c0_3] : memref<3x49x49xf32, #tpu.memory_space<vmem>>, vector<1x49x49xf32>
    %3 = vector.shape_cast %2 : vector<1x49x49xf32> to vector<49x49xf32>
    %c2 = arith.constant 2 : index
    %c0_4 = arith.constant 0 : index
    %c0_5 = arith.constant 0 : index
    %4 = vector.load %arg7[%c2, %c0_4, %c0_5] : memref<3x49x49xf32, #tpu.memory_space<vmem>>, vector<1x49x49xf32>
    %5 = vector.shape_cast %4 : vector<1x49x49xf32> to vector<49x49xf32>
    %c0_6 = arith.constant 0 : index
    %c0_7 = arith.constant 0 : index
    %6 = vector.load %arg3[%c0_6, %c0_7] : memref<64x128xf32, #tpu.memory_space<vmem>>, vector<64x128xf32>
    %c0_8 = arith.constant 0 : index
    %c0_9 = arith.constant 0 : index
    %7 = vector.load %arg4[%c0_8, %c0_9] : memref<64x1xf32, #tpu.memory_space<vmem>>, vector<64x1xf32>
    %c0_10 = arith.constant 0 : index
    %c0_11 = arith.constant 0 : index
    %8 = vector.load %arg5[%c0_10, %c0_11] : memref<16x256xf32, #tpu.memory_space<vmem>>, vector<16x256xf32>
    %c0_12 = arith.constant 0 : index
    %c0_13 = arith.constant 0 : index
    %9 = vector.load %arg6[%c0_12, %c0_13] : memref<1x1xf32, #tpu.memory_space<vmem>>, vector<1x1xf32>
    %c0_14 = arith.constant 0 : index
    %c0_15 = arith.constant 0 : index
    %10 = vector.load %arg2[%c0_14, %c0_15] : memref<32x49xf32, #tpu.memory_space<vmem>>, vector<32x49xf32>
    %c0_16 = arith.constant 0 : index
    %c0_17 = arith.constant 0 : index
    %11 = memref.load %arg0[%c0_16, %c0_17] : memref<2x8xf32, #tpu.memory_space<smem>>
    %c0_18 = arith.constant 0 : index
    %c0_19 = arith.constant 0 : index
    %c0_20 = arith.constant 0 : index
    %12 = vector.load %arg1[%c0_18, %c0_19, %c0_20] : memref<8x32x49xf32, #tpu.memory_space<vmem>>, vector<1x32x49xf32>
    %13 = vector.shape_cast %12 : vector<1x32x49xf32> to vector<32x49xf32>
    %14 = vector.broadcast %11 : f32 to vector<32x49xf32>
    %15 = arith.mulf %14, %13 : vector<32x49xf32>
    %16 = arith.addf %10, %15 : vector<32x49xf32>
    %c0_21 = arith.constant 0 : index
    %c1_22 = arith.constant 1 : index
    %17 = memref.load %arg0[%c0_21, %c1_22] : memref<2x8xf32, #tpu.memory_space<smem>>
    %c1_23 = arith.constant 1 : index
    %c0_24 = arith.constant 0 : index
    %c0_25 = arith.constant 0 : index
    %18 = vector.load %arg1[%c1_23, %c0_24, %c0_25] : memref<8x32x49xf32, #tpu.memory_space<vmem>>, vector<1x32x49xf32>
    %19 = vector.shape_cast %18 : vector<1x32x49xf32> to vector<32x49xf32>
    %20 = vector.broadcast %17 : f32 to vector<32x49xf32>
    %21 = arith.mulf %20, %19 : vector<32x49xf32>
    %22 = arith.addf %16, %21 : vector<32x49xf32>
    %c0_26 = arith.constant 0 : index
    %c2_27 = arith.constant 2 : index
    %23 = memref.load %arg0[%c0_26, %c2_27] : memref<2x8xf32, #tpu.memory_space<smem>>
    %c2_28 = arith.constant 2 : index
    %c0_29 = arith.constant 0 : index
    %c0_30 = arith.constant 0 : index
    %24 = vector.load %arg1[%c2_28, %c0_29, %c0_30] : memref<8x32x49xf32, #tpu.memory_space<vmem>>, vector<1x32x49xf32>
    %25 = vector.shape_cast %24 : vector<1x32x49xf32> to vector<32x49xf32>
    %26 = vector.broadcast %23 : f32 to vector<32x49xf32>
    %27 = arith.mulf %26, %25 : vector<32x49xf32>
    %28 = arith.addf %22, %27 : vector<32x49xf32>
    %c0_31 = arith.constant 0 : index
    %c3 = arith.constant 3 : index
    %29 = memref.load %arg0[%c0_31, %c3] : memref<2x8xf32, #tpu.memory_space<smem>>
    %c3_32 = arith.constant 3 : index
    %c0_33 = arith.constant 0 : index
    %c0_34 = arith.constant 0 : index
    %30 = vector.load %arg1[%c3_32, %c0_33, %c0_34] : memref<8x32x49xf32, #tpu.memory_space<vmem>>, vector<1x32x49xf32>
    %31 = vector.shape_cast %30 : vector<1x32x49xf32> to vector<32x49xf32>
    %32 = vector.broadcast %29 : f32 to vector<32x49xf32>
    %33 = arith.mulf %32, %31 : vector<32x49xf32>
    %34 = arith.addf %28, %33 : vector<32x49xf32>
    %c0_35 = arith.constant 0 : index
    %c4 = arith.constant 4 : index
    %35 = memref.load %arg0[%c0_35, %c4] : memref<2x8xf32, #tpu.memory_space<smem>>
    %c4_36 = arith.constant 4 : index
    %c0_37 = arith.constant 0 : index
    %c0_38 = arith.constant 0 : index
    %36 = vector.load %arg1[%c4_36, %c0_37, %c0_38] : memref<8x32x49xf32, #tpu.memory_space<vmem>>, vector<1x32x49xf32>
    %37 = vector.shape_cast %36 : vector<1x32x49xf32> to vector<32x49xf32>
    %38 = vector.broadcast %35 : f32 to vector<32x49xf32>
    %39 = arith.mulf %38, %37 : vector<32x49xf32>
    %40 = arith.addf %34, %39 : vector<32x49xf32>
    %c0_39 = arith.constant 0 : index
    %c5 = arith.constant 5 : index
    %41 = memref.load %arg0[%c0_39, %c5] : memref<2x8xf32, #tpu.memory_space<smem>>
    %c5_40 = arith.constant 5 : index
    %c0_41 = arith.constant 0 : index
    %c0_42 = arith.constant 0 : index
    %42 = vector.load %arg1[%c5_40, %c0_41, %c0_42] : memref<8x32x49xf32, #tpu.memory_space<vmem>>, vector<1x32x49xf32>
    %43 = vector.shape_cast %42 : vector<1x32x49xf32> to vector<32x49xf32>
    %44 = vector.broadcast %41 : f32 to vector<32x49xf32>
    %45 = arith.mulf %44, %43 : vector<32x49xf32>
    %46 = arith.addf %40, %45 : vector<32x49xf32>
    %c0_43 = arith.constant 0 : index
    %c6 = arith.constant 6 : index
    %47 = memref.load %arg0[%c0_43, %c6] : memref<2x8xf32, #tpu.memory_space<smem>>
    %c6_44 = arith.constant 6 : index
    %c0_45 = arith.constant 0 : index
    %c0_46 = arith.constant 0 : index
    %48 = vector.load %arg1[%c6_44, %c0_45, %c0_46] : memref<8x32x49xf32, #tpu.memory_space<vmem>>, vector<1x32x49xf32>
    %49 = vector.shape_cast %48 : vector<1x32x49xf32> to vector<32x49xf32>
    %50 = vector.broadcast %47 : f32 to vector<32x49xf32>
    %51 = arith.mulf %50, %49 : vector<32x49xf32>
    %52 = arith.addf %46, %51 : vector<32x49xf32>
    %c0_47 = arith.constant 0 : index
    %c7 = arith.constant 7 : index
    %53 = memref.load %arg0[%c0_47, %c7] : memref<2x8xf32, #tpu.memory_space<smem>>
    %c7_48 = arith.constant 7 : index
    %c0_49 = arith.constant 0 : index
    %c0_50 = arith.constant 0 : index
    %54 = vector.load %arg1[%c7_48, %c0_49, %c0_50] : memref<8x32x49xf32, #tpu.memory_space<vmem>>, vector<1x32x49xf32>
    %55 = vector.shape_cast %54 : vector<1x32x49xf32> to vector<32x49xf32>
    %56 = vector.broadcast %53 : f32 to vector<32x49xf32>
    %57 = arith.mulf %56, %55 : vector<32x49xf32>
    %58 = arith.addf %52, %57 : vector<32x49xf32>
    %cst = arith.constant dense<0.000000e+00> : vector<32x49xf32>
    %59 = tpu.matmul %58, %1, %cst {dimension_numbers = #tpu.dot_dimension_numbers<[1], [0], [0], [1], [0, 0, 1, 1], [], []>} : vector<32x49xf32>, vector<49x49xf32>, vector<32x49xf32> -> vector<32x49xf32>
    %cst_51 = arith.constant dense<0.000000e+00> : vector<32x49xf32>
    %60 = tpu.matmul %58, %3, %cst_51 {dimension_numbers = #tpu.dot_dimension_numbers<[1], [0], [0], [1], [0, 0, 1, 1], [], []>} : vector<32x49xf32>, vector<49x49xf32>, vector<32x49xf32> -> vector<32x49xf32>
    %cst_52 = arith.constant dense<0.000000e+00> : vector<32x49xf32>
    %61 = tpu.matmul %58, %5, %cst_52 {dimension_numbers = #tpu.dot_dimension_numbers<[1], [0], [0], [1], [0, 0, 1, 1], [], []>} : vector<32x49xf32>, vector<49x49xf32>, vector<32x49xf32> -> vector<32x49xf32>
    %62 = tpu.concatenate %58, %59, %60, %61 in 0 : vector<32x49xf32>, vector<32x49xf32>, vector<32x49xf32>, vector<32x49xf32> -> vector<128x49xf32>
    %cst_53 = arith.constant dense<0.000000e+00> : vector<64x49xf32>
    %63 = tpu.matmul %6, %62, %cst_53 {dimension_numbers = #tpu.dot_dimension_numbers<[1], [0], [0], [1], [0, 0, 1, 1], [], []>} : vector<64x128xf32>, vector<128x49xf32>, vector<64x49xf32> -> vector<64x49xf32>
    %64 = vector.broadcast %7 : vector<64x1xf32> to vector<64x49xf32>
    %65 = arith.addf %63, %64 : vector<64x49xf32>
    %cst_54 = arith.constant 0.000000e+00 : f32
    %66 = vector.broadcast %cst_54 : f32 to vector<64x49xf32>
    %67 = arith.maximumf %65, %66 : vector<64x49xf32>
    %cst_55 = arith.constant dense<0.000000e+00> : vector<64x49xf32>
    %68 = tpu.matmul %67, %1, %cst_55 {dimension_numbers = #tpu.dot_dimension_numbers<[1], [0], [0], [1], [0, 0, 1, 1], [], []>} : vector<64x49xf32>, vector<49x49xf32>, vector<64x49xf32> -> vector<64x49xf32>
    %cst_56 = arith.constant dense<0.000000e+00> : vector<64x49xf32>
    %69 = tpu.matmul %67, %3, %cst_56 {dimension_numbers = #tpu.dot_dimension_numbers<[1], [0], [0], [1], [0, 0, 1, 1], [], []>} : vector<64x49xf32>, vector<49x49xf32>, vector<64x49xf32> -> vector<64x49xf32>
    %cst_57 = arith.constant dense<0.000000e+00> : vector<64x49xf32>
    %70 = tpu.matmul %67, %5, %cst_57 {dimension_numbers = #tpu.dot_dimension_numbers<[1], [0], [0], [1], [0, 0, 1, 1], [], []>} : vector<64x49xf32>, vector<49x49xf32>, vector<64x49xf32> -> vector<64x49xf32>
    %71 = tpu.concatenate %67, %68, %69, %70 in 0 : vector<64x49xf32>, vector<64x49xf32>, vector<64x49xf32>, vector<64x49xf32> -> vector<256x49xf32>
    %cst_58 = arith.constant dense<0.000000e+00> : vector<16x49xf32>
    %72 = tpu.matmul %8, %71, %cst_58 {dimension_numbers = #tpu.dot_dimension_numbers<[1], [0], [0], [1], [0, 0, 1, 1], [], []>} : vector<16x256xf32>, vector<256x49xf32>, vector<16x49xf32> -> vector<16x49xf32>
    %73 = vector.broadcast %9 : vector<1x1xf32> to vector<16x49xf32>
    %74 = arith.addf %72, %73 : vector<16x49xf32>
    %75 = arith.negf %74 : vector<16x49xf32>
    %76 = math.exp %75 : vector<16x49xf32>
    %cst_59 = arith.constant 1.000000e+00 : f32
    %77 = vector.broadcast %cst_59 : f32 to vector<16x49xf32>
    %78 = arith.addf %77, %76 : vector<16x49xf32>
    %79 = arith.divf %77, %78 : vector<16x49xf32>
    %c0_60 = arith.constant 0 : index
    %c0_61 = arith.constant 0 : index
    %c0_62 = arith.constant 0 : index
    %80 = vector.load %arg8[%c0_60, %c0_61, %c0_62] : memref<2x16x49xf32, #tpu.memory_space<vmem>>, vector<1x16x49xf32>
    %81 = vector.shape_cast %80 : vector<1x16x49xf32> to vector<16x49xf32>
    %82 = vector.shape_cast %79 : vector<16x49xf32> to vector<1x16x49xf32>
    tpu.vector_store %arg8[%c0_60, %c0_61, %c0_62], %82 {strides = array<i32>} : memref<2x16x49xf32, #tpu.memory_space<vmem>>, vector<1x16x49xf32>,
    %c1_63 = arith.constant 1 : index
    %c0_64 = arith.constant 0 : index
    %83 = memref.load %arg0[%c1_63, %c0_64] : memref<2x8xf32, #tpu.memory_space<smem>>
    %c0_65 = arith.constant 0 : index
    %c0_66 = arith.constant 0 : index
    %c0_67 = arith.constant 0 : index
    %84 = vector.load %arg1[%c0_65, %c0_66, %c0_67] : memref<8x32x49xf32, #tpu.memory_space<vmem>>, vector<1x32x49xf32>
    %85 = vector.shape_cast %84 : vector<1x32x49xf32> to vector<32x49xf32>
    %86 = vector.broadcast %83 : f32 to vector<32x49xf32>
    %87 = arith.mulf %86, %85 : vector<32x49xf32>
    %88 = arith.addf %10, %87 : vector<32x49xf32>
    %c1_68 = arith.constant 1 : index
    %c1_69 = arith.constant 1 : index
    %89 = memref.load %arg0[%c1_68, %c1_69] : memref<2x8xf32, #tpu.memory_space<smem>>
    %c1_70 = arith.constant 1 : index
    %c0_71 = arith.constant 0 : index
    %c0_72 = arith.constant 0 : index
    %90 = vector.load %arg1[%c1_70, %c0_71, %c0_72] : memref<8x32x49xf32, #tpu.memory_space<vmem>>, vector<1x32x49xf32>
    %91 = vector.shape_cast %90 : vector<1x32x49xf32> to vector<32x49xf32>
    %92 = vector.broadcast %89 : f32 to vector<32x49xf32>
    %93 = arith.mulf %92, %91 : vector<32x49xf32>
    %94 = arith.addf %88, %93 : vector<32x49xf32>
    %c1_73 = arith.constant 1 : index
    %c2_74 = arith.constant 2 : index
    %95 = memref.load %arg0[%c1_73, %c2_74] : memref<2x8xf32, #tpu.memory_space<smem>>
    %c2_75 = arith.constant 2 : index
    %c0_76 = arith.constant 0 : index
    %c0_77 = arith.constant 0 : index
    %96 = vector.load %arg1[%c2_75, %c0_76, %c0_77] : memref<8x32x49xf32, #tpu.memory_space<vmem>>, vector<1x32x49xf32>
    %97 = vector.shape_cast %96 : vector<1x32x49xf32> to vector<32x49xf32>
    %98 = vector.broadcast %95 : f32 to vector<32x49xf32>
    %99 = arith.mulf %98, %97 : vector<32x49xf32>
    %100 = arith.addf %94, %99 : vector<32x49xf32>
    %c1_78 = arith.constant 1 : index
    %c3_79 = arith.constant 3 : index
    %101 = memref.load %arg0[%c1_78, %c3_79] : memref<2x8xf32, #tpu.memory_space<smem>>
    %c3_80 = arith.constant 3 : index
    %c0_81 = arith.constant 0 : index
    %c0_82 = arith.constant 0 : index
    %102 = vector.load %arg1[%c3_80, %c0_81, %c0_82] : memref<8x32x49xf32, #tpu.memory_space<vmem>>, vector<1x32x49xf32>
    %103 = vector.shape_cast %102 : vector<1x32x49xf32> to vector<32x49xf32>
    %104 = vector.broadcast %101 : f32 to vector<32x49xf32>
    %105 = arith.mulf %104, %103 : vector<32x49xf32>
    %106 = arith.addf %100, %105 : vector<32x49xf32>
    %c1_83 = arith.constant 1 : index
    %c4_84 = arith.constant 4 : index
    %107 = memref.load %arg0[%c1_83, %c4_84] : memref<2x8xf32, #tpu.memory_space<smem>>
    %c4_85 = arith.constant 4 : index
    %c0_86 = arith.constant 0 : index
    %c0_87 = arith.constant 0 : index
    %108 = vector.load %arg1[%c4_85, %c0_86, %c0_87] : memref<8x32x49xf32, #tpu.memory_space<vmem>>, vector<1x32x49xf32>
    %109 = vector.shape_cast %108 : vector<1x32x49xf32> to vector<32x49xf32>
    %110 = vector.broadcast %107 : f32 to vector<32x49xf32>
    %111 = arith.mulf %110, %109 : vector<32x49xf32>
    %112 = arith.addf %106, %111 : vector<32x49xf32>
    %c1_88 = arith.constant 1 : index
    %c5_89 = arith.constant 5 : index
    %113 = memref.load %arg0[%c1_88, %c5_89] : memref<2x8xf32, #tpu.memory_space<smem>>
    %c5_90 = arith.constant 5 : index
    %c0_91 = arith.constant 0 : index
    %c0_92 = arith.constant 0 : index
    %114 = vector.load %arg1[%c5_90, %c0_91, %c0_92] : memref<8x32x49xf32, #tpu.memory_space<vmem>>, vector<1x32x49xf32>
    %115 = vector.shape_cast %114 : vector<1x32x49xf32> to vector<32x49xf32>
    %116 = vector.broadcast %113 : f32 to vector<32x49xf32>
    %117 = arith.mulf %116, %115 : vector<32x49xf32>
    %118 = arith.addf %112, %117 : vector<32x49xf32>
    %c1_93 = arith.constant 1 : index
    %c6_94 = arith.constant 6 : index
    %119 = memref.load %arg0[%c1_93, %c6_94] : memref<2x8xf32, #tpu.memory_space<smem>>
    %c6_95 = arith.constant 6 : index
    %c0_96 = arith.constant 0 : index
    %c0_97 = arith.constant 0 : index
    %120 = vector.load %arg1[%c6_95, %c0_96, %c0_97] : memref<8x32x49xf32, #tpu.memory_space<vmem>>, vector<1x32x49xf32>
    %121 = vector.shape_cast %120 : vector<1x32x49xf32> to vector<32x49xf32>
    %122 = vector.broadcast %119 : f32 to vector<32x49xf32>
    %123 = arith.mulf %122, %121 : vector<32x49xf32>
    %124 = arith.addf %118, %123 : vector<32x49xf32>
    %c1_98 = arith.constant 1 : index
    %c7_99 = arith.constant 7 : index
    %125 = memref.load %arg0[%c1_98, %c7_99] : memref<2x8xf32, #tpu.memory_space<smem>>
    %c7_100 = arith.constant 7 : index
    %c0_101 = arith.constant 0 : index
    %c0_102 = arith.constant 0 : index
    %126 = vector.load %arg1[%c7_100, %c0_101, %c0_102] : memref<8x32x49xf32, #tpu.memory_space<vmem>>, vector<1x32x49xf32>
    %127 = vector.shape_cast %126 : vector<1x32x49xf32> to vector<32x49xf32>
    %128 = vector.broadcast %125 : f32 to vector<32x49xf32>
    %129 = arith.mulf %128, %127 : vector<32x49xf32>
    %130 = arith.addf %124, %129 : vector<32x49xf32>
    %cst_103 = arith.constant dense<0.000000e+00> : vector<32x49xf32>
    %131 = tpu.matmul %130, %1, %cst_103 {dimension_numbers = #tpu.dot_dimension_numbers<[1], [0], [0], [1], [0, 0, 1, 1], [], []>} : vector<32x49xf32>, vector<49x49xf32>, vector<32x49xf32> -> vector<32x49xf32>
    %cst_104 = arith.constant dense<0.000000e+00> : vector<32x49xf32>
    %132 = tpu.matmul %130, %3, %cst_104 {dimension_numbers = #tpu.dot_dimension_numbers<[1], [0], [0], [1], [0, 0, 1, 1], [], []>} : vector<32x49xf32>, vector<49x49xf32>, vector<32x49xf32> -> vector<32x49xf32>
    %cst_105 = arith.constant dense<0.000000e+00> : vector<32x49xf32>
    %133 = tpu.matmul %130, %5, %cst_105 {dimension_numbers = #tpu.dot_dimension_numbers<[1], [0], [0], [1], [0, 0, 1, 1], [], []>} : vector<32x49xf32>, vector<49x49xf32>, vector<32x49xf32> -> vector<32x49xf32>
    %134 = tpu.concatenate %130, %131, %132, %133 in 0 : vector<32x49xf32>, vector<32x49xf32>, vector<32x49xf32>, vector<32x49xf32> -> vector<128x49xf32>
    %cst_106 = arith.constant dense<0.000000e+00> : vector<64x49xf32>
    %135 = tpu.matmul %6, %134, %cst_106 {dimension_numbers = #tpu.dot_dimension_numbers<[1], [0], [0], [1], [0, 0, 1, 1], [], []>} : vector<64x128xf32>, vector<128x49xf32>, vector<64x49xf32> -> vector<64x49xf32>
    %136 = vector.broadcast %7 : vector<64x1xf32> to vector<64x49xf32>
    %137 = arith.addf %135, %136 : vector<64x49xf32>
    %cst_107 = arith.constant 0.000000e+00 : f32
    %138 = vector.broadcast %cst_107 : f32 to vector<64x49xf32>
    %139 = arith.maximumf %137, %138 : vector<64x49xf32>
    %cst_108 = arith.constant dense<0.000000e+00> : vector<64x49xf32>
    %140 = tpu.matmul %139, %1, %cst_108 {dimension_numbers = #tpu.dot_dimension_numbers<[1], [0], [0], [1], [0, 0, 1, 1], [], []>} : vector<64x49xf32>, vector<49x49xf32>, vector<64x49xf32> -> vector<64x49xf32>
    %cst_109 = arith.constant dense<0.000000e+00> : vector<64x49xf32>
    %141 = tpu.matmul %139, %3, %cst_109 {dimension_numbers = #tpu.dot_dimension_numbers<[1], [0], [0], [1], [0, 0, 1, 1], [], []>} : vector<64x49xf32>, vector<49x49xf32>, vector<64x49xf32> -> vector<64x49xf32>
    %cst_110 = arith.constant dense<0.000000e+00> : vector<64x49xf32>
    %142 = tpu.matmul %139, %5, %cst_110 {dimension_numbers = #tpu.dot_dimension_numbers<[1], [0], [0], [1], [0, 0, 1, 1], [], []>} : vector<64x49xf32>, vector<49x49xf32>, vector<64x49xf32> -> vector<64x49xf32>
    %143 = tpu.concatenate %139, %140, %141, %142 in 0 : vector<64x49xf32>, vector<64x49xf32>, vector<64x49xf32>, vector<64x49xf32> -> vector<256x49xf32>
    %cst_111 = arith.constant dense<0.000000e+00> : vector<16x49xf32>
    %144 = tpu.matmul %8, %143, %cst_111 {dimension_numbers = #tpu.dot_dimension_numbers<[1], [0], [0], [1], [0, 0, 1, 1], [], []>} : vector<16x256xf32>, vector<256x49xf32>, vector<16x49xf32> -> vector<16x49xf32>
    %145 = vector.broadcast %9 : vector<1x1xf32> to vector<16x49xf32>
    %146 = arith.addf %144, %145 : vector<16x49xf32>
    %147 = arith.negf %146 : vector<16x49xf32>
    %148 = math.exp %147 : vector<16x49xf32>
    %cst_112 = arith.constant 1.000000e+00 : f32
    %149 = vector.broadcast %cst_112 : f32 to vector<16x49xf32>
    %150 = arith.addf %149, %148 : vector<16x49xf32>
    %151 = arith.divf %149, %150 : vector<16x49xf32>
    %c1_113 = arith.constant 1 : index
    %c0_114 = arith.constant 0 : index
    %c0_115 = arith.constant 0 : index
    %152 = vector.load %arg8[%c1_113, %c0_114, %c0_115] : memref<2x16x49xf32, #tpu.memory_space<vmem>>, vector<1x16x49xf32>
    %153 = vector.shape_cast %152 : vector<1x16x49xf32> to vector<16x49xf32>
    %154 = vector.shape_cast %151 : vector<16x49xf32> to vector<1x16x49xf32>
    tpu.vector_store %arg8[%c1_113, %c0_114, %c0_115], %154 {strides = array<i32>} : memref<2x16x49xf32, #tpu.memory_space<vmem>>, vector<1x16x49xf32>,
    return
  }
}

</mosaic_0001>

<llo_original>
// kernel: decoder_forward.1
$region0: #{decoder_forward.1}
  #allocation0 [shape = 'u32[]', space=smem, size = 0x4, offset = 0x4, fixed_abs, tag = 'smem constant byte address 0x4 - core index']
  #allocation1 [shape = 'u32[144,128]{1,0:T(1,128)}', space=vmem, size = 0x12000, scoped, tag = 'internal scratch']
  #allocation2 [shape = 'f32[1,1]{1,0:T(1,128)S(1)}', space=vmem, size = 0x200, scoped, tag = 'scoped memory for decoder_forward.1']
  %s0 = inlined_call_operand.vmem [shape: f32[2,8], index: 0, kind: input, shape index: {}]
  %s1 = inlined_call_operand.hbm [shape: f32[8,32,49], index: 1, kind: input, shape index: {}]
  %s2 = inlined_call_operand.hbm [shape: f32[32,49], index: 2, kind: input, shape index: {}]
  %s3 = inlined_call_operand.vmem [shape: f32[64,128], index: 3, kind: input, shape index: {}]
  %s4 = inlined_call_operand.vmem [shape: f32[64,1], index: 4, kind: input, shape index: {}]
  %s5 = inlined_call_operand.hbm [shape: f32[16,256], index: 5, kind: input, shape index: {}]
  %s6 = inlined_call_operand.<no memory space> [shape: f32[1,1], index: 6, kind: input, shape index: {}]
  %s7 = inlined_call_operand.hbm [shape: f32[3,49,49], index: 7, kind: input, shape index: {}]
  %s8 = inlined_call_operand.vmem [shape: f32[2,16,49], index: 8, kind: output, shape index: {}]
  %s9 = sld [smem:[#allocation0]]
  $region62: #{decoder_forward.1} parent=0
    _
  %s11 = ssub.s32 1, %s9
  %s12 = scalar_select 0, %s11, %s9
  %v13 = vstv %s6
  %14 = vst [vmem:[#allocation2] sm:$0x1] %v13
  $region1: #{decoder_forward.1} parent=0
    #allocation3 [shape = 'u8[1024]{0}', space=smem, size = 0x400, scoped, tag = 'input window, operand 0, single buffered']
    #allocation4 [shape = 's32[1]{0}', space=sflag, size = 0x4, scoped, tag = 'scoped memory for decoder_forward.1']
    #allocation5 [shape = 's32[1]{0}', space=sflag, size = 0x4, scoped, tag = 'scoped memory for decoder_forward.1']
    #allocation6 [shape = 'u8[131072]{0}', space=vmem, size = 0x20000, scoped, tag = 'input window, operand 1, single buffered']
    #allocation7 [shape = 'u8[16384]{0}', space=vmem, size = 0x4000, scoped, tag = 'input window, operand 2, single buffered']
    #allocation8 [shape = 's32[1]{0}', space=sflag, size = 0x4, scoped, tag = 'scoped memory for decoder_forward.1']
    #allocation9 [shape = 'u8[16384]{0}', space=vmem, size = 0x4000, scoped, tag = 'input window, operand 5, single buffered']
    #allocation10 [shape = 'u8[86016]{0}', space=vmem, size = 0x15000, scoped, tag = 'input window, operand 7, single buffered']
    #allocation11 [shape = 's32[1]{0}', space=sflag, size = 0x4, scoped, tag = 'scoped memory for decoder_forward.1']
    %15 = vsyncpa [#allocation5], 0
    %16 = vsyncpa [#allocation4], 0
    %17 = vsyncpa [#allocation8], 0
    %18 = vsyncpa [#allocation11], 0
    // Predicated region
    $region2: #{decoder_forward.1} parent=1 // pred_check
      _
    $region3: #{decoder_forward.1} parent=1 // pred_check_branch
      %20 = sbr.rel (0) target = $region5
    $region4: #{decoder_forward.1} parent=1 // pred_region
      %s22 = ssub.s32 32, 32
      %23 = vsyncadd [#allocation5], %s22
      %s25 = sshll.u32 %s0, 4
      %s26 = int_to_ptr.vmem [resolvable:$true] %s25
      %28 = dma.vmem_to_smem %s26, 32, [#allocation3], [#allocation5]
    $region5: #{decoder_forward.1} parent=1 // pred_fallthru
      _
    // Predicated region
    $region6: #{decoder_forward.1} parent=1 // pred_check
      _
    $region7: #{decoder_forward.1} parent=1 // pred_check_branch
      %30 = sbr.rel (0) target = $region9
    $region8: #{decoder_forward.1} parent=1 // pred_region
      %s32 = ssub.s32 4096, 4096
      %33 = vsyncadd [#allocation4], %s32
      %s34 = sshll.u32 [#allocation6], 4
      %s35 = int_to_ptr.vmem [resolvable:$true] %s34
      %40 = dma.hbm_to_vmem [thread:$0]  %s1, 4096, %s35, [#allocation4], 128, 128, 8
    $region9: #{decoder_forward.1} parent=1 // pred_fallthru
      _
    // Predicated region
    $region10: #{decoder_forward.1} parent=1 // pred_check
      _
    $region11: #{decoder_forward.1} parent=1 // pred_check_branch
      %42 = sbr.rel (0) target = $region13
    $region12: #{decoder_forward.1} parent=1 // pred_region
      %s44 = ssub.s32 512, 512
      %45 = vsyncadd [#allocation8], %s44
      %s46 = sshll.u32 [#allocation7], 4
      %s47 = int_to_ptr.vmem [resolvable:$true] %s46
      %52 = dma.hbm_to_vmem [thread:$0]  %s2, 512, %s47, [#allocation8], 128, 128, 8
    $region13: #{decoder_forward.1} parent=1 // pred_fallthru
      _
    // Predicated region
    $region14: #{decoder_forward.1} parent=1 // pred_check
      _
    $region15: #{decoder_forward.1} parent=1 // pred_check_branch
      %54 = sbr.rel (0) target = $region17
    $region16: #{decoder_forward.1} parent=1 // pred_region
      _
    $region17: #{decoder_forward.1} parent=1 // pred_fallthru
      _
    // Predicated region
    $region18: #{decoder_forward.1} parent=1 // pred_check
      _
    $region19: #{decoder_forward.1} parent=1 // pred_check_branch
      %56 = sbr.rel (0) target = $region21
    $region20: #{decoder_forward.1} parent=1 // pred_region
      _
    $region21: #{decoder_forward.1} parent=1 // pred_fallthru
      _
    // Predicated region
    $region22: #{decoder_forward.1} parent=1 // pred_check
      _
    $region23: #{decoder_forward.1} parent=1 // pred_check_branch
      %58 = sbr.rel (0) target = $region25
    $region24: #{decoder_forward.1} parent=1 // pred_region
      %s60 = ssub.s32 512, 512
      %61 = vsyncadd [#allocation8], %s60
      %s62 = sshll.u32 [#allocation9], 4
      %s63 = int_to_ptr.vmem [resolvable:$true] %s62
      %68 = dma.hbm_to_vmem [thread:$0]  %s5, 512, %s63, [#allocation8], 256, 256, 16
    $region25: #{decoder_forward.1} parent=1 // pred_fallthru
      _
    // Predicated region
    $region26: #{decoder_forward.1} parent=1 // pred_check
      _
    $region27: #{decoder_forward.1} parent=1 // pred_check_branch
      %70 = sbr.rel (0) target = $region29
    $region28: #{decoder_forward.1} parent=1 // pred_region
      _
    $region29: #{decoder_forward.1} parent=1 // pred_fallthru
      _
    // Predicated region
    $region30: #{decoder_forward.1} parent=1 // pred_check
      _
    $region31: #{decoder_forward.1} parent=1 // pred_check_branch
      %72 = sbr.rel (0) target = $region33
    $region32: #{decoder_forward.1} parent=1 // pred_region
      %s74 = ssub.s32 2688, 2688
      %75 = vsyncadd [#allocation11], %s74
      %s76 = sshll.u32 [#allocation10], 4
      %s77 = int_to_ptr.vmem [resolvable:$true] %s76
      %82 = dma.hbm_to_vmem [thread:$0]  %s7, 2688, %s77, [#allocation11], 128, 128, 8
    $region33: #{decoder_forward.1} parent=1 // pred_fallthru
      _
    // Predicated region
    $region34: #{decoder_forward.1} parent=1 // pred_check
      _
    $region35: #{decoder_forward.1} parent=1 // pred_check_branch
      %84 = sbr.rel (0) target = $region37
    $region36: #{decoder_forward.1} parent=1 // pred_region
      %85 = dma.done [#allocation5], 32
    $region37: #{decoder_forward.1} parent=1 // pred_fallthru
      _
    // Predicated region
    $region38: #{decoder_forward.1} parent=1 // pred_check
      _
    $region39: #{decoder_forward.1} parent=1 // pred_check_branch
      %87 = sbr.rel (0) target = $region41
    $region40: #{decoder_forward.1} parent=1 // pred_region
      %88 = dma.done [#allocation4], 4096
    $region41: #{decoder_forward.1} parent=1 // pred_fallthru
      _
    // Predicated region
    $region42: #{decoder_forward.1} parent=1 // pred_check
      _
    $region43: #{decoder_forward.1} parent=1 // pred_check_branch
      %90 = sbr.rel (0) target = $region45
    $region44: #{decoder_forward.1} parent=1 // pred_region
      %91 = dma.done [#allocation8], 512
    $region45: #{decoder_forward.1} parent=1 // pred_fallthru
      _
    // Predicated region
    $region46: #{decoder_forward.1} parent=1 // pred_check
      _
    $region47: #{decoder_forward.1} parent=1 // pred_check_branch
      %93 = sbr.rel (0) target = $region49
    $region48: #{decoder_forward.1} parent=1 // pred_region
      %94 = dma.done [#allocation8], 512
    $region49: #{decoder_forward.1} parent=1 // pred_fallthru
      _
    // Predicated region
    $region50: #{decoder_forward.1} parent=1 // pred_check
      _
    $region51: #{decoder_forward.1} parent=1 // pred_check_branch
      %96 = sbr.rel (0) target = $region53
    $region52: #{decoder_forward.1} parent=1 // pred_region
      %97 = dma.done [#allocation11], 2688
    $region53: #{decoder_forward.1} parent=1 // pred_fallthru
      _
    %98 = sfence
    %v99 = vld [vmem:[#allocation10] sm:$0xff]
    %v100 = vld [vmem:[#allocation10 + $0x8] sm:$0xff]
    %v101 = vld [vmem:[#allocation10 + $0x10] sm:$0xff]
    %v102 = vld [vmem:[#allocation10 + $0x18] sm:$0xff]
    %v103 = vld [vmem:[#allocation10 + $0x20] sm:$0xff]
    %v104 = vld [vmem:[#allocation10 + $0x28] sm:$0xff]
    %v105 = vld [vmem:[#allocation10 + $0x30] sm:$0x1]
    %s106 = scalar_lea.vmem [#allocation10], 56
    %v107 = vld [vmem:[%s106] sm:$0xff]
    %v108 = vld [vmem:[%s106 + $0x8] sm:$0xff]
    %v109 = vld [vmem:[%s106 + $0x10] sm:$0xff]
    %v110 = vld [vmem:[%s106 + $0x18] sm:$0xff]
    %v111 = vld [vmem:[%s106 + $0x20] sm:$0xff]
    %v112 = vld [vmem:[%s106 + $0x28] sm:$0xff]
    %v113 = vld [vmem:[%s106 + $0x30] sm:$0x1]
    %s114 = scalar_lea.vmem [#allocation10], 112
    %v115 = vld [vmem:[%s114] sm:$0xff]
    %v116 = vld [vmem:[%s114 + $0x8] sm:$0xff]
    %v117 = vld [vmem:[%s114 + $0x10] sm:$0xff]
    %v118 = vld [vmem:[%s114 + $0x18] sm:$0xff]
    %v119 = vld [vmem:[%s114 + $0x20] sm:$0xff]
    %v120 = vld [vmem:[%s114 + $0x28] sm:$0xff]
    %v121 = vld [vmem:[%s114 + $0x30] sm:$0x1]
    %v122 = vld [vmem:[%s3] sm:$0xff]
    %v123 = vld [vmem:[%s3 + $0x8] sm:$0xff]
    %v124 = vld [vmem:[%s3 + $0x10] sm:$0xff]
    %v125 = vld [vmem:[%s3 + $0x18] sm:$0xff]
    %v126 = vld [vmem:[%s3 + $0x20] sm:$0xff]
    %v127 = vld [vmem:[%s3 + $0x28] sm:$0xff]
    %v128 = vld [vmem:[%s3 + $0x30] sm:$0xff]
    %v129 = vld [vmem:[%s3 + $0x38] sm:$0xff]
    %v130 = vld [vmem:[%s4] sm:$0xff]
    %v131 = vld [vmem:[%s4 + $0x8] sm:$0xff]
    %v132 = vld [vmem:[%s4 + $0x10] sm:$0xff]
    %v133 = vld [vmem:[%s4 + $0x18] sm:$0xff]
    %v134 = vld [vmem:[%s4 + $0x20] sm:$0xff]
    %v135 = vld [vmem:[%s4 + $0x28] sm:$0xff]
    %v136 = vld [vmem:[%s4 + $0x30] sm:$0xff]
    %v137 = vld [vmem:[%s4 + $0x38] sm:$0xff]
    %v138 = vld [vmem:[#allocation9] sm:$0xff]
    %v139 = vld [vmem:[#allocation9 + $0x8] sm:$0xff]
    %v140 = vld [vmem:[#allocation9 + $0x10] sm:$0xff]
    %v141 = vld [vmem:[#allocation9 + $0x18] sm:$0xff]
    %v142 = vld [vmem:[#allocation2] sm:$0x1]
    %v143 = vld [vmem:[#allocation7] sm:$0xff]
    %v144 = vld [vmem:[#allocation7 + $0x8] sm:$0xff]
    %v145 = vld [vmem:[#allocation7 + $0x10] sm:$0xff]
    %v146 = vld [vmem:[#allocation7 + $0x18] sm:$0xff]
    %s147 = sld [smem:[#allocation3]]
    %v148 = vld [vmem:[#allocation6] sm:$0xff]
    %v149 = vld [vmem:[#allocation6 + $0x8] sm:$0xff]
    %v150 = vld [vmem:[#allocation6 + $0x10] sm:$0xff]
    %v151 = vld [vmem:[#allocation6 + $0x18] sm:$0xff]
    %v152 = vstv %s147
    %v153 = vmul.f32 %v152, %v148
    %v154 = vmul.f32 %v152, %v149
    %v155 = vmul.f32 %v152, %v150
    %v156 = vmul.f32 %v152, %v151
    %v157 = vadd.f32 %v143, %v153
    %v158 = vadd.f32 %v144, %v154
    %v159 = vadd.f32 %v145, %v155
    %v160 = vadd.f32 %v146, %v156
    %s161 = sld [smem:[#allocation3 + $0x1]]
    %s162 = scalar_lea.vmem [#allocation6], 32
    %v163 = vld [vmem:[%s162] sm:$0xff]
    %v164 = vld [vmem:[%s162 + $0x8] sm:$0xff]
    %v165 = vld [vmem:[%s162 + $0x10] sm:$0xff]
    %v166 = vld [vmem:[%s162 + $0x18] sm:$0xff]
    %v167 = vstv %s161
    %v168 = vmul.f32 %v167, %v163
    %v169 = vmul.f32 %v167, %v164
    %v170 = vmul.f32 %v167, %v165
    %v171 = vmul.f32 %v167, %v166
    %v172 = vadd.f32 %v157, %v168
    %v173 = vadd.f32 %v158, %v169
    %v174 = vadd.f32 %v159, %v170
    %v175 = vadd.f32 %v160, %v171
    %s176 = sld [smem:[#allocation3 + $0x2]]
    %s177 = scalar_lea.vmem [#allocation6], 64
    %v178 = vld [vmem:[%s177] sm:$0xff]
    %v179 = vld [vmem:[%s177 + $0x8] sm:$0xff]
    %v180 = vld [vmem:[%s177 + $0x10] sm:$0xff]
    %v181 = vld [vmem:[%s177 + $0x18] sm:$0xff]
    %v182 = vstv %s176
    %v183 = vmul.f32 %v182, %v178
    %v184 = vmul.f32 %v182, %v179
    %v185 = vmul.f32 %v182, %v180
    %v186 = vmul.f32 %v182, %v181
    %v187 = vadd.f32 %v172, %v183
    %v188 = vadd.f32 %v173, %v184
    %v189 = vadd.f32 %v174, %v185
    %v190 = vadd.f32 %v175, %v186
    %s191 = sld [smem:[#allocation3 + $0x3]]
    %s192 = scalar_lea.vmem [#allocation6], 96
    %v193 = vld [vmem:[%s192] sm:$0xff]
    %v194 = vld [vmem:[%s192 + $0x8] sm:$0xff]
    %v195 = vld [vmem:[%s192 + $0x10] sm:$0xff]
    %v196 = vld [vmem:[%s192 + $0x18] sm:$0xff]
    %v197 = vstv %s191
    %v198 = vmul.f32 %v197, %v193
    %v199 = vmul.f32 %v197, %v194
    %v200 = vmul.f32 %v197, %v195
    %v201 = vmul.f32 %v197, %v196
    %v202 = vadd.f32 %v187, %v198
    %v203 = vadd.f32 %v188, %v199
    %v204 = vadd.f32 %v189, %v200
    %v205 = vadd.f32 %v190, %v201
    %s206 = sld [smem:[#allocation3 + $0x4]]
    %s207 = scalar_lea.vmem [#allocation6], 128
    %v208 = vld [vmem:[%s207] sm:$0xff]
    %v209 = vld [vmem:[%s207 + $0x8] sm:$0xff]
    %v210 = vld [vmem:[%s207 + $0x10] sm:$0xff]
    %v211 = vld [vmem:[%s207 + $0x18] sm:$0xff]
    %v212 = vstv %s206
    %v213 = vmul.f32 %v212, %v208
    %v214 = vmul.f32 %v212, %v209
    %v215 = vmul.f32 %v212, %v210
    %v216 = vmul.f32 %v212, %v211
    %v217 = vadd.f32 %v202, %v213
    %v218 = vadd.f32 %v203, %v214
    %v219 = vadd.f32 %v204, %v215
    %v220 = vadd.f32 %v205, %v216
    %s221 = sld [smem:[#allocation3 + $0x5]]
    %s222 = scalar_lea.vmem [#allocation6], 160
    %v223 = vld [vmem:[%s222] sm:$0xff]
    %v224 = vld [vmem:[%s222 + $0x8] sm:$0xff]
    %v225 = vld [vmem:[%s222 + $0x10] sm:$0xff]
    %v226 = vld [vmem:[%s222 + $0x18] sm:$0xff]
    %v227 = vstv %s221
    %v228 = vmul.f32 %v227, %v223
    %v229 = vmul.f32 %v227, %v224
    %v230 = vmul.f32 %v227, %v225
    %v231 = vmul.f32 %v227, %v226
    %v232 = vadd.f32 %v217, %v228
    %v233 = vadd.f32 %v218, %v229
    %v234 = vadd.f32 %v219, %v230
    %v235 = vadd.f32 %v220, %v231
    %s236 = sld [smem:[#allocation3 + $0x6]]
    %s237 = scalar_lea.vmem [#allocation6], 192
    %v238 = vld [vmem:[%s237] sm:$0xff]
    %v239 = vld [vmem:[%s237 + $0x8] sm:$0xff]
    %v240 = vld [vmem:[%s237 + $0x10] sm:$0xff]
    %v241 = vld [vmem:[%s237 + $0x18] sm:$0xff]
    %v242 = vstv %s236
    %v243 = vmul.f32 %v242, %v238
    %v244 = vmul.f32 %v242, %v239
    %v245 = vmul.f32 %v242, %v240
    %v246 = vmul.f32 %v242, %v241
    %v247 = vadd.f32 %v232, %v243
    %v248 = vadd.f32 %v233, %v244
    %v249 = vadd.f32 %v234, %v245
    %v250 = vadd.f32 %v235, %v246
    %s251 = sld [smem:[#allocation3 + $0x7]]
    %s252 = scalar_lea.vmem [#allocation6], 224
    %v253 = vld [vmem:[%s252] sm:$0xff]
    %v254 = vld [vmem:[%s252 + $0x8] sm:$0xff]
    %v255 = vld [vmem:[%s252 + $0x10] sm:$0xff]
    %v256 = vld [vmem:[%s252 + $0x18] sm:$0xff]
    %v257 = vstv %s251
    %v258 = vmul.f32 %v257, %v253
    %v259 = vmul.f32 %v257, %v254
    %v260 = vmul.f32 %v257, %v255
    %v261 = vmul.f32 %v257, %v256
    %v262 = vadd.f32 %v247, %v258
    %v263 = vadd.f32 %v248, %v259
    %v264 = vadd.f32 %v249, %v260
    %v265 = vadd.f32 %v250, %v261
    %vm266 = vcmask 400384
    %v268 = vsel %vm266, %v262, 0
    %v271 = vsel %vm266, %v263, 0
    %v274 = vsel %vm266, %v264, 0
    %v277 = vsel %vm266, %v265, 0
    %vm279 = vcmask 1040384
    %v281 = vsel %vm279, %v105, 0
    %283 = vmatprep.subr.mxu0 0.0
    %284 = vmatpush1.msra.mxu0 %v99
    %285 = vmatprep.subr.mxu0 0.0
    %286 = vmatpush1.msra.mxu0 %v100
    %287 = vmatprep.subr.mxu0 0.0
    %288 = vmatpush1.msra.mxu0 %v101
    %289 = vmatprep.subr.mxu0 0.0
    %290 = vmatpush1.msra.mxu0 %v102
    %291 = vmatprep.subr.mxu0 0.0
    %292 = vmatpush1.msra.mxu0 %v103
    %293 = vmatprep.subr.mxu0 0.0
    %294 = vmatpush1.msra.mxu0 %v104
    %295 = vmatprep.subr.mxu0 0.0
    %296 = vmatpush1.msra.mxu0 %v281
    %297 = vmatprep.subr.mxu0 0.0
    %298 = vmatpush1.msra.mxu0 0.0
    %299 = vmatprep.subr.mxu0 0.0
    %300 = vmatpush1.msra.mxu0 0.0
    %301 = vmatprep.subr.mxu0 0.0
    %302 = vmatpush1.msra.mxu0 0.0
    %303 = vmatprep.subr.mxu0 0.0
    %304 = vmatpush1.msra.mxu0 0.0
    %305 = vmatprep.subr.mxu0 0.0
    %306 = vmatpush1.msra.mxu0 0.0
    %307 = vmatprep.subr.mxu0 0.0
    %308 = vmatpush1.msra.mxu0 0.0
    %309 = vmatprep.subr.mxu0 0.0
    %310 = vmatpush1.msra.mxu0 0.0
    %311 = vmatprep.subr.mxu0 0.0
    %312 = vmatpush1.msra.mxu0 0.0
    %313 = vmatprep.subr.mxu0 0.0
    %314 = vmatpush1.msra.mxu0 0.0
    %315 = vmatprep.subr.mxu0 0.0
    %316 = vmatpush1.msra.mxu0 0.0
    %317 = vmatprep.subr.mxu0 0.0
    %318 = vmatpush1.msra.mxu0 0.0
    %319 = vmatprep.subr.mxu0 0.0
    %320 = vmatpush1.msra.mxu0 0.0
    %321 = vmatprep.subr.mxu0 0.0
    %322 = vmatpush1.msra.mxu0 0.0
    %323 = vmatprep.subr.mxu0 0.0
    %324 = vmatpush1.msra.mxu0 0.0
    %325 = vmatprep.subr.mxu0 0.0
    %326 = vmatpush1.msra.mxu0 0.0
    %327 = vmatprep.subr.mxu0 0.0
    %328 = vmatpush1.msra.mxu0 0.0
    %329 = vmatprep.subr.mxu0 0.0
    %330 = vmatpush1.msra.mxu0 0.0
    %331 = vmatprep.subr.mxu0 0.0
    %332 = vmatpush1.msra.mxu0 0.0
    %333 = vmatprep.subr.mxu0 0.0
    %334 = vmatpush1.msra.mxu0 0.0
    %335 = vmatprep.subr.mxu0 0.0
    %336 = vmatpush1.msra.mxu0 0.0
    %337 = vmatprep.subr.mxu0 0.0
    %338 = vmatpush1.msra.mxu0 0.0
    %339 = vmatprep.subr.mxu0 0.0
    %340 = vmatpush1.msra.mxu0 0.0
    %341 = vmatprep.subr.mxu0 0.0
    %342 = vmatpush1.msra.mxu0 0.0
    %343 = vmatprep.subr.mxu0 0.0
    %344 = vmatpush1.msra.mxu0 0.0
    %345 = vmatprep.subr.mxu0 0.0
    %346 = vmatpush1.msra.mxu0 0.0
    %347 = vmatprep.mubr.f32.mxu0 0.0
    %348 = vmatmul.mubr.f32.gmra.mrb[0].mxu0 %v268
    %v349 = vpop.f32.mrb[0].mxu0
    %v350 = vadd.f32 0.0, %v349
    %v351 = vpop.f32.mrb[0].mxu0
    %352 = vmatprep.mubr.f32.mxu0 0.0
    %353 = vmatmul.mubr.f32.gmra.mrb[0].mxu0 %v271
    %v354 = vpop.f32.mrb[0].mxu0
    %v355 = vadd.f32 0.0, %v354
    %v356 = vpop.f32.mrb[0].mxu0
    %357 = vmatprep.mubr.f32.mxu0 0.0
    %358 = vmatmul.mubr.f32.gmra.mrb[0].mxu0 %v274
    %v359 = vpop.f32.mrb[0].mxu0
    %v360 = vadd.f32 0.0, %v359
    %v361 = vpop.f32.mrb[0].mxu0
    %362 = vmatprep.mubr.f32.mxu0 0.0
    %363 = vmatmul.mubr.f32.gmra.mrb[0].mxu0 %v277
    %v364 = vpop.f32.mrb[0].mxu0
    %v365 = vadd.f32 0.0, %v364
    %v366 = vpop.f32.mrb[0].mxu0
    %367 = vdwg.mxu0
    %v369 = vsel %vm279, %v113, 0
    %371 = vmatprep.subr.mxu0 0.0
    %372 = vmatpush1.msra.mxu0 %v107
    %373 = vmatprep.subr.mxu0 0.0
    %374 = vmatpush1.msra.mxu0 %v108
    %375 = vmatprep.subr.mxu0 0.0
    %376 = vmatpush1.msra.mxu0 %v109
    %377 = vmatprep.subr.mxu0 0.0
    %378 = vmatpush1.msra.mxu0 %v110
    %379 = vmatprep.subr.mxu0 0.0
    %380 = vmatpush1.msra.mxu0 %v111
    %381 = vmatprep.subr.mxu0 0.0
    %382 = vmatpush1.msra.mxu0 %v112
    %383 = vmatprep.subr.mxu0 0.0
    %384 = vmatpush1.msra.mxu0 %v369
    %385 = vmatprep.subr.mxu0 0.0
    %386 = vmatpush1.msra.mxu0 0.0
    %387 = vmatprep.subr.mxu0 0.0
    %388 = vmatpush1.msra.mxu0 0.0
    %389 = vmatprep.subr.mxu0 0.0
    %390 = vmatpush1.msra.mxu0 0.0
    %391 = vmatprep.subr.mxu0 0.0
    %392 = vmatpush1.msra.mxu0 0.0
    %393 = vmatprep.subr.mxu0 0.0
    %394 = vmatpush1.msra.mxu0 0.0
    %395 = vmatprep.subr.mxu0 0.0
    %396 = vmatpush1.msra.mxu0 0.0
    %397 = vmatprep.subr.mxu0 0.0
    %398 = vmatpush1.msra.mxu0 0.0
    %399 = vmatprep.subr.mxu0 0.0
    %400 = vmatpush1.msra.mxu0 0.0
    %401 = vmatprep.subr.mxu0 0.0
    %402 = vmatpush1.msra.mxu0 0.0
    %403 = vmatprep.subr.mxu0 0.0
    %404 = vmatpush1.msra.mxu0 0.0
    %405 = vmatprep.subr.mxu0 0.0
    %406 = vmatpush1.msra.mxu0 0.0
    %407 = vmatprep.subr.mxu0 0.0
    %408 = vmatpush1.msra.mxu0 0.0
    %409 = vmatprep.subr.mxu0 0.0
    %410 = vmatpush1.msra.mxu0 0.0
    %411 = vmatprep.subr.mxu0 0.0
    %412 = vmatpush1.msra.mxu0 0.0
    %413 = vmatprep.subr.mxu0 0.0
    %414 = vmatpush1.msra.mxu0 0.0
    %415 = vmatprep.subr.mxu0 0.0
    %416 = vmatpush1.msra.mxu0 0.0
    %417 = vmatprep.subr.mxu0 0.0
    %418 = vmatpush1.msra.mxu0 0.0
    %419 = vmatprep.subr.mxu0 0.0
    %420 = vmatpush1.msra.mxu0 0.0
    %421 = vmatprep.subr.mxu0 0.0
    %422 = vmatpush1.msra.mxu0 0.0
    %423 = vmatprep.subr.mxu0 0.0
    %424 = vmatpush1.msra.mxu0 0.0
    %425 = vmatprep.subr.mxu0 0.0
    %426 = vmatpush1.msra.mxu0 0.0
    %427 = vmatprep.subr.mxu0 0.0
    %428 = vmatpush1.msra.mxu0 0.0
    %429 = vmatprep.subr.mxu0 0.0
    %430 = vmatpush1.msra.mxu0 0.0
    %431 = vmatprep.subr.mxu0 0.0
    %432 = vmatpush1.msra.mxu0 0.0
    %433 = vmatprep.subr.mxu0 0.0
    %434 = vmatpush1.msra.mxu0 0.0
    %435 = vmatprep.mubr.f32.mxu0 0.0
    %436 = vmatmul.mubr.f32.gmra.mrb[0].mxu0 %v268
    %v437 = vpop.f32.mrb[0].mxu0
    %v438 = vadd.f32 0.0, %v437
    %v439 = vpop.f32.mrb[0].mxu0
    %440 = vmatprep.mubr.f32.mxu0 0.0
    %441 = vmatmul.mubr.f32.gmra.mrb[0].mxu0 %v271
    %v442 = vpop.f32.mrb[0].mxu0
    %v443 = vadd.f32 0.0, %v442
    %v444 = vpop.f32.mrb[0].mxu0
    %445 = vmatprep.mubr.f32.mxu0 0.0
    %446 = vmatmul.mubr.f32.gmra.mrb[0].mxu0 %v274
    %v447 = vpop.f32.mrb[0].mxu0
    %v448 = vadd.f32 0.0, %v447
    %v449 = vpop.f32.mrb[0].mxu0
    %450 = vmatprep.mubr.f32.mxu0 0.0
    %451 = vmatmul.mubr.f32.gmra.mrb[0].mxu0 %v277
    %v452 = vpop.f32.mrb[0].mxu0
    %v453 = vadd.f32 0.0, %v452
    %v454 = vpop.f32.mrb[0].mxu0
    %455 = vdwg.mxu0
    %v457 = vsel %vm279, %v121, 0
    %459 = vmatprep.subr.mxu0 0.0
    %460 = vmatpush1.msra.mxu0 %v115
    %461 = vmatprep.subr.mxu0 0.0
    %462 = vmatpush1.msra.mxu0 %v116
    %463 = vmatprep.subr.mxu0 0.0
    %464 = vmatpush1.msra.mxu0 %v117
    %465 = vmatprep.subr.mxu0 0.0
    %466 = vmatpush1.msra.mxu0 %v118
    %467 = vmatprep.subr.mxu0 0.0
    %468 = vmatpush1.msra.mxu0 %v119
    %469 = vmatprep.subr.mxu0 0.0
    %470 = vmatpush1.msra.mxu0 %v120
    %471 = vmatprep.subr.mxu0 0.0
    %472 = vmatpush1.msra.mxu0 %v457
    %473 = vmatprep.subr.mxu0 0.0
    %474 = vmatpush1.msra.mxu0 0.0
    %475 = vmatprep.subr.mxu0 0.0
    %476 = vmatpush1.msra.mxu0 0.0
    %477 = vmatprep.subr.mxu0 0.0
    %478 = vmatpush1.msra.mxu0 0.0
    %479 = vmatprep.subr.mxu0 0.0
    %480 = vmatpush1.msra.mxu0 0.0
    %481 = vmatprep.subr.mxu0 0.0
    %482 = vmatpush1.msra.mxu0 0.0
    %483 = vmatprep.subr.mxu0 0.0
    %484 = vmatpush1.msra.mxu0 0.0
    %485 = vmatprep.subr.mxu0 0.0
    %486 = vmatpush1.msra.mxu0 0.0
    %487 = vmatprep.subr.mxu0 0.0
    %488 = vmatpush1.msra.mxu0 0.0
    %489 = vmatprep.subr.mxu0 0.0
    %490 = vmatpush1.msra.mxu0 0.0
    %491 = vmatprep.subr.mxu0 0.0
    %492 = vmatpush1.msra.mxu0 0.0
    %493 = vmatprep.subr.mxu0 0.0
    %494 = vmatpush1.msra.mxu0 0.0
    %495 = vmatprep.subr.mxu0 0.0
    %496 = vmatpush1.msra.mxu0 0.0
    %497 = vmatprep.subr.mxu0 0.0
    %498 = vmatpush1.msra.mxu0 0.0
    %499 = vmatprep.subr.mxu0 0.0
    %500 = vmatpush1.msra.mxu0 0.0
    %501 = vmatprep.subr.mxu0 0.0
    %502 = vmatpush1.msra.mxu0 0.0
    %503 = vmatprep.subr.mxu0 0.0
    %504 = vmatpush1.msra.mxu0 0.0
    %505 = vmatprep.subr.mxu0 0.0
    %506 = vmatpush1.msra.mxu0 0.0
    %507 = vmatprep.subr.mxu0 0.0
    %508 = vmatpush1.msra.mxu0 0.0
    %509 = vmatprep.subr.mxu0 0.0
    %510 = vmatpush1.msra.mxu0 0.0
    %511 = vmatprep.subr.mxu0 0.0
    %512 = vmatpush1.msra.mxu0 0.0
    %513 = vmatprep.subr.mxu0 0.0
    %514 = vmatpush1.msra.mxu0 0.0
    %515 = vmatprep.subr.mxu0 0.0
    %516 = vmatpush1.msra.mxu0 0.0
    %517 = vmatprep.subr.mxu0 0.0
    %518 = vmatpush1.msra.mxu0 0.0
    %519 = vmatprep.subr.mxu0 0.0
    %520 = vmatpush1.msra.mxu0 0.0
    %521 = vmatprep.subr.mxu0 0.0
    %522 = vmatpush1.msra.mxu0 0.0
    %523 = vmatprep.mubr.f32.mxu0 0.0
    %524 = vmatmul.mubr.f32.gmra.mrb[0].mxu0 %v268
    %v525 = vpop.f32.mrb[0].mxu0
    %v526 = vadd.f32 0.0, %v525
    %v527 = vpop.f32.mrb[0].mxu0
    %528 = vmatprep.mubr.f32.mxu0 0.0
    %529 = vmatmul.mubr.f32.gmra.mrb[0].mxu0 %v271
    %v530 = vpop.f32.mrb[0].mxu0
    %v531 = vadd.f32 0.0, %v530
    %v532 = vpop.f32.mrb[0].mxu0
    %533 = vmatprep.mubr.f32.mxu0 0.0
    %534 = vmatmul.mubr.f32.gmra.mrb[0].mxu0 %v274
    %v535 = vpop.f32.mrb[0].mxu0
    %v536 = vadd.f32 0.0, %v535
    %v537 = vpop.f32.mrb[0].mxu0
    %538 = vmatprep.mubr.f32.mxu0 0.0
    %539 = vmatmul.mubr.f32.gmra.mrb[0].mxu0 %v277
    %v540 = vpop.f32.mrb[0].mxu0
    %v541 = vadd.f32 0.0, %v540
    %v542 = vpop.f32.mrb[0].mxu0
    %543 = vdwg.mxu0
    %545 = vset.pattern.permute.xlu0 0
    %546 = vperm.xlu0 %545, %v130
    %v547 = vpop.permute.xlu0 %546
    %550 = vset.pattern.permute.xlu0 0
    %551 = vperm.xlu0 %550, %v131
    %v552 = vpop.permute.xlu0 %551
    %555 = vset.pattern.permute.xlu0 0
    %556 = vperm.xlu0 %555, %v132
    %v557 = vpop.permute.xlu0 %556
    %560 = vset.pattern.permute.xlu0 0
    %561 = vperm.xlu0 %560, %v133
    %v562 = vpop.permute.xlu0 %561
    %565 = vset.pattern.permute.xlu0 0
    %566 = vperm.xlu0 %565, %v134
    %v567 = vpop.permute.xlu0 %566
    %570 = vset.pattern.permute.xlu0 0
    %571 = vperm.xlu0 %570, %v135
    %v572 = vpop.permute.xlu0 %571
    %575 = vset.pattern.permute.xlu0 0
    %576 = vperm.xlu0 %575, %v136
    %v577 = vpop.permute.xlu0 %576
    %580 = vset.pattern.permute.xlu0 0
    %581 = vperm.xlu0 %580, %v137
    %v582 = vpop.permute.xlu0 %581
    %584 = vmatprep.subr.mxu0 0.0
    %585 = vmatpush1.msra.mxu0 %v262
    %586 = vmatprep.subr.mxu0 0.0
    %587 = vmatpush1.msra.mxu0 %v263
    %588 = vmatprep.subr.mxu0 0.0
    %589 = vmatpush1.msra.mxu0 %v264
    %590 = vmatprep.subr.mxu0 0.0
    %591 = vmatpush1.msra.mxu0 %v265
    %592 = vmatprep.subr.mxu0 0.0
    %593 = vmatpush1.msra.mxu0 %v350
    %594 = vmatprep.subr.mxu0 0.0
    %595 = vmatpush1.msra.mxu0 %v355
    %596 = vmatprep.subr.mxu0 0.0
    %597 = vmatpush1.msra.mxu0 %v360
    %598 = vmatprep.subr.mxu0 0.0
    %599 = vmatpush1.msra.mxu0 %v365
    %600 = vmatprep.subr.mxu0 0.0
    %601 = vmatpush1.msra.mxu0 %v438
    %602 = vmatprep.subr.mxu0 0.0
    %603 = vmatpush1.msra.mxu0 %v443
    %604 = vmatprep.subr.mxu0 0.0
    %605 = vmatpush1.msra.mxu0 %v448
    %606 = vmatprep.subr.mxu0 0.0
    %607 = vmatpush1.msra.mxu0 %v453
    %608 = vmatprep.subr.mxu0 0.0
    %609 = vmatpush1.msra.mxu0 %v526
    %610 = vmatprep.subr.mxu0 0.0
    %611 = vmatpush1.msra.mxu0 %v531
    %612 = vmatprep.subr.mxu0 0.0
    %613 = vmatpush1.msra.mxu0 %v536
    %614 = vmatprep.subr.mxu0 0.0
    %615 = vmatpush1.msra.mxu0 %v541
    %616 = vmatprep.subr.mxu0 0.0
    %617 = vmatpush1.msra.mxu0 0.0
    %618 = vmatprep.subr.mxu0 0.0
    %619 = vmatpush1.msra.mxu0 0.0
    %620 = vmatprep.subr.mxu0 0.0
    %621 = vmatpush1.msra.mxu0 0.0
    %622 = vmatprep.subr.mxu0 0.0
    %623 = vmatpush1.msra.mxu0 0.0
    %624 = vmatprep.subr.mxu0 0.0
    %625 = vmatpush1.msra.mxu0 0.0
    %626 = vmatprep.subr.mxu0 0.0
    %627 = vmatpush1.msra.mxu0 0.0
    %628 = vmatprep.subr.mxu0 0.0
    %629 = vmatpush1.msra.mxu0 0.0
    %630 = vmatprep.subr.mxu0 0.0
    %631 = vmatpush1.msra.mxu0 0.0
    %632 = vmatprep.subr.mxu0 0.0
    %633 = vmatpush1.msra.mxu0 0.0
    %634 = vmatprep.subr.mxu0 0.0
    %635 = vmatpush1.msra.mxu0 0.0
    %636 = vmatprep.subr.mxu0 0.0
    %637 = vmatpush1.msra.mxu0 0.0
    %638 = vmatprep.subr.mxu0 0.0
    %639 = vmatpush1.msra.mxu0 0.0
    %640 = vmatprep.subr.mxu0 0.0
    %641 = vmatpush1.msra.mxu0 0.0
    %642 = vmatprep.subr.mxu0 0.0
    %643 = vmatpush1.msra.mxu0 0.0
    %644 = vmatprep.subr.mxu0 0.0
    %645 = vmatpush1.msra.mxu0 0.0
    %646 = vmatprep.subr.mxu0 0.0
    %647 = vmatpush1.msra.mxu0 0.0
    %648 = vmatprep.mubr.f32.mxu0 0.0
    %649 = vmatmul.mubr.f32.gmra.mrb[0].mxu0 %v122
    %v650 = vpop.f32.mrb[0].mxu0
    %v651 = vadd.f32 %v547, %v650
    %v652 = vpop.f32.mrb[0].mxu0
    %653 = vmatprep.mubr.f32.mxu0 0.0
    %654 = vmatmul.mubr.f32.gmra.mrb[0].mxu0 %v123
    %v655 = vpop.f32.mrb[0].mxu0
    %v656 = vadd.f32 %v552, %v655
    %v657 = vpop.f32.mrb[0].mxu0
    %658 = vmatprep.mubr.f32.mxu0 0.0
    %659 = vmatmul.mubr.f32.gmra.mrb[0].mxu0 %v124
    %v660 = vpop.f32.mrb[0].mxu0
    %v661 = vadd.f32 %v557, %v660
    %v662 = vpop.f32.mrb[0].mxu0
    %663 = vmatprep.mubr.f32.mxu0 0.0
    %664 = vmatmul.mubr.f32.gmra.mrb[0].mxu0 %v125
    %v665 = vpop.f32.mrb[0].mxu0
    %v666 = vadd.f32 %v562, %v665
    %v667 = vpop.f32.mrb[0].mxu0
    %668 = vmatprep.mubr.f32.mxu0 0.0
    %669 = vmatmul.mubr.f32.gmra.mrb[0].mxu0 %v126
    %v670 = vpop.f32.mrb[0].mxu0
    %v671 = vadd.f32 %v567, %v670
    %v672 = vpop.f32.mrb[0].mxu0
    %673 = vmatprep.mubr.f32.mxu0 0.0
    %674 = vmatmul.mubr.f32.gmra.mrb[0].mxu0 %v127
    %v675 = vpop.f32.mrb[0].mxu0
    %v676 = vadd.f32 %v572, %v675
    %v677 = vpop.f32.mrb[0].mxu0
    %678 = vmatprep.mubr.f32.mxu0 0.0
    %679 = vmatmul.mubr.f32.gmra.mrb[0].mxu0 %v128
    %v680 = vpop.f32.mrb[0].mxu0
    %v681 = vadd.f32 %v577, %v680
    %v682 = vpop.f32.mrb[0].mxu0
    %683 = vmatprep.mubr.f32.mxu0 0.0
    %684 = vmatmul.mubr.f32.gmra.mrb[0].mxu0 %v129
    %v685 = vpop.f32.mrb[0].mxu0
    %v686 = vadd.f32 %v582, %v685
    %v687 = vpop.f32.mrb[0].mxu0
    %688 = vdwg.mxu0
    %v689 = vmax.f32 %v651, 0.0
    %v690 = vmax.f32 %v656, 0.0
    %v691 = vmax.f32 %v661, 0.0
    %v692 = vmax.f32 %v666, 0.0
    %v693 = vmax.f32 %v671, 0.0
    %v694 = vmax.f32 %v676, 0.0
    %v695 = vmax.f32 %v681, 0.0
    %v696 = vmax.f32 %v686, 0.0
    %v698 = vsel %vm266, %v689, 0
    %v701 = vsel %vm266, %v690, 0
    %v704 = vsel %vm266, %v691, 0
    %v707 = vsel %vm266, %v692, 0
    %v710 = vsel %vm266, %v693, 0
    %v713 = vsel %vm266, %v694, 0
    %v716 = vsel %vm266, %v695, 0
    %v719 = vsel %vm266, %v696, 0
    %721 = vmatprep.subr.mxu0 0.0
    %722 = vmatpush1.msra.mxu0 %v99
    %723 = vmatprep.subr.mxu0 0.0
    %724 = vmatpush1.msra.mxu0 %v100
    %725 = vmatprep.subr.mxu0 0.0
    %726 = vmatpush1.msra.mxu0 %v101
    %727 = vmatprep.subr.mxu0 0.0
    %728 = vmatpush1.msra.mxu0 %v102
    %729 = vmatprep.subr.mxu0 0.0
    %730 = vmatpush1.msra.mxu0 %v103
    %731 = vmatprep.subr.mxu0 0.0
    %732 = vmatpush1.msra.mxu0 %v104
    %733 = vmatprep.subr.mxu0 0.0
    %734 = vmatpush1.msra.mxu0 %v281
    %735 = vmatprep.subr.mxu0 0.0
    %736 = vmatpush1.msra.mxu0 0.0
    %737 = vmatprep.subr.mxu0 0.0
    %738 = vmatpush1.msra.mxu0 0.0
    %739 = vmatprep.subr.mxu0 0.0
    %740 = vmatpush1.msra.mxu0 0.0
    %741 = vmatprep.subr.mxu0 0.0
    %742 = vmatpush1.msra.mxu0 0.0
    %743 = vmatprep.subr.mxu0 0.0
    %744 = vmatpush1.msra.mxu0 0.0
    %745 = vmatprep.subr.mxu0 0.0
    %746 = vmatpush1.msra.mxu0 0.0
    %747 = vmatprep.subr.mxu0 0.0
    %748 = vmatpush1.msra.mxu0 0.0
    %749 = vmatprep.subr.mxu0 0.0
    %750 = vmatpush1.msra.mxu0 0.0
    %751 = vmatprep.subr.mxu0 0.0
    %752 = vmatpush1.msra.mxu0 0.0
    %753 = vmatprep.subr.mxu0 0.0
    %754 = vmatpush1.msra.mxu0 0.0
    %755 = vmatprep.subr.mxu0 0.0
    %756 = vmatpush1.msra.mxu0 0.0
    %757 = vmatprep.subr.mxu0 0.0
    %758 = vmatpush1.msra.mxu0 0.0
    %759 = vmatprep.subr.mxu0 0.0
    %760 = vmatpush1.msra.mxu0 0.0
    %761 = vmatprep.subr.mxu0 0.0
    %762 = vmatpush1.msra.mxu0 0.0
    %763 = vmatprep.subr.mxu0 0.0
    %764 = vmatpush1.msra.mxu0 0.0
    %765 = vmatprep.subr.mxu0 0.0
    %766 = vmatpush1.msra.mxu0 0.0
    %767 = vmatprep.subr.mxu0 0.0
    %768 = vmatpush1.msra.mxu0 0.0
    %769 = vmatprep.subr.mxu0 0.0
    %770 = vmatpush1.msra.mxu0 0.0
    %771 = vmatprep.subr.mxu0 0.0
    %772 = vmatpush1.msra.mxu0 0.0
    %773 = vmatprep.subr.mxu0 0.0
    %774 = vmatpush1.msra.mxu0 0.0
    %775 = vmatprep.subr.mxu0 0.0
    %776 = vmatpush1.msra.mxu0 0.0
    %777 = vmatprep.subr.mxu0 0.0
    %778 = vmatpush1.msra.mxu0 0.0
    %779 = vmatprep.subr.mxu0 0.0
    %780 = vmatpush1.msra.mxu0 0.0
    %781 = vmatprep.subr.mxu0 0.0
    %782 = vmatpush1.msra.mxu0 0.0
    %783 = vmatprep.subr.mxu0 0.0
    %784 = vmatpush1.msra.mxu0 0.0
    %785 = vmatprep.mubr.f32.mxu0 0.0
    %786 = vmatmul.mubr.f32.gmra.mrb[0].mxu0 %v698
    %v787 = vpop.f32.mrb[0].mxu0
    %v788 = vadd.f32 0.0, %v787
    %v789 = vpop.f32.mrb[0].mxu0
    %790 = vmatprep.mubr.f32.mxu0 0.0
    %791 = vmatmul.mubr.f32.gmra.mrb[0].mxu0 %v701
    %v792 = vpop.f32.mrb[0].mxu0
    %v793 = vadd.f32 0.0, %v792
    %v794 = vpop.f32.mrb[0].mxu0
    %795 = vmatprep.mubr.f32.mxu0 0.0
    %796 = vmatmul.mubr.f32.gmra.mrb[0].mxu0 %v704
    %v797 = vpop.f32.mrb[0].mxu0
    %v798 = vadd.f32 0.0, %v797
    %v799 = vpop.f32.mrb[0].mxu0
    %800 = vmatprep.mubr.f32.mxu0 0.0
    %801 = vmatmul.mubr.f32.gmra.mrb[0].mxu0 %v707
    %v802 = vpop.f32.mrb[0].mxu0
    %v803 = vadd.f32 0.0, %v802
    %v804 = vpop.f32.mrb[0].mxu0
    %805 = vmatprep.mubr.f32.mxu0 0.0
    %806 = vmatmul.mubr.f32.gmra.mrb[0].mxu0 %v710
    %v807 = vpop.f32.mrb[0].mxu0
    %v808 = vadd.f32 0.0, %v807
    %v809 = vpop.f32.mrb[0].mxu0
    %810 = vmatprep.mubr.f32.mxu0 0.0
    %811 = vmatmul.mubr.f32.gmra.mrb[0].mxu0 %v713
    %v812 = vpop.f32.mrb[0].mxu0
    %v813 = vadd.f32 0.0, %v812
    %v814 = vpop.f32.mrb[0].mxu0
    %815 = vmatprep.mubr.f32.mxu0 0.0
    %816 = vmatmul.mubr.f32.gmra.mrb[0].mxu0 %v716
    %v817 = vpop.f32.mrb[0].mxu0
    %v818 = vadd.f32 0.0, %v817
    %v819 = vpop.f32.mrb[0].mxu0
    %820 = vmatprep.mubr.f32.mxu0 0.0
    %821 = vmatmul.mubr.f32.gmra.mrb[0].mxu0 %v719
    %v822 = vpop.f32.mrb[0].mxu0
    %v823 = vadd.f32 0.0, %v822
    %v824 = vpop.f32.mrb[0].mxu0
    %825 = vdwg.mxu0
    %826 = vmatprep.subr.mxu0 0.0
    %827 = vmatpush1.msra.mxu0 %v107
    %828 = vmatprep.subr.mxu0 0.0
    %829 = vmatpush1.msra.mxu0 %v108
    %830 = vmatprep.subr.mxu0 0.0
    %831 = vmatpush1.msra.mxu0 %v109
    %832 = vmatprep.subr.mxu0 0.0
    %833 = vmatpush1.msra.mxu0 %v110
    %834 = vmatprep.subr.mxu0 0.0
    %835 = vmatpush1.msra.mxu0 %v111
    %836 = vmatprep.subr.mxu0 0.0
    %837 = vmatpush1.msra.mxu0 %v112
    %838 = vmatprep.subr.mxu0 0.0
    %839 = vmatpush1.msra.mxu0 %v369
    %840 = vmatprep.subr.mxu0 0.0
    %841 = vmatpush1.msra.mxu0 0.0
    %842 = vmatprep.subr.mxu0 0.0
    %843 = vmatpush1.msra.mxu0 0.0
    %844 = vmatprep.subr.mxu0 0.0
    %845 = vmatpush1.msra.mxu0 0.0
    %846 = vmatprep.subr.mxu0 0.0
    %847 = vmatpush1.msra.mxu0 0.0
    %848 = vmatprep.subr.mxu0 0.0
    %849 = vmatpush1.msra.mxu0 0.0
    %850 = vmatprep.subr.mxu0 0.0
    %851 = vmatpush1.msra.mxu0 0.0
    %852 = vmatprep.subr.mxu0 0.0
    %853 = vmatpush1.msra.mxu0 0.0
    %854 = vmatprep.subr.mxu0 0.0
    %855 = vmatpush1.msra.mxu0 0.0
    %856 = vmatprep.subr.mxu0 0.0
    %857 = vmatpush1.msra.mxu0 0.0
    %858 = vmatprep.subr.mxu0 0.0
    %859 = vmatpush1.msra.mxu0 0.0
    %860 = vmatprep.subr.mxu0 0.0
    %861 = vmatpush1.msra.mxu0 0.0
    %862 = vmatprep.subr.mxu0 0.0
    %863 = vmatpush1.msra.mxu0 0.0
    %864 = vmatprep.subr.mxu0 0.0
    %865 = vmatpush1.msra.mxu0 0.0
    %866 = vmatprep.subr.mxu0 0.0
    %867 = vmatpush1.msra.mxu0 0.0
    %868 = vmatprep.subr.mxu0 0.0
    %869 = vmatpush1.msra.mxu0 0.0
    %870 = vmatprep.subr.mxu0 0.0
    %871 = vmatpush1.msra.mxu0 0.0
    %872 = vmatprep.subr.mxu0 0.0
    %873 = vmatpush1.msra.mxu0 0.0
    %874 = vmatprep.subr.mxu0 0.0
    %875 = vmatpush1.msra.mxu0 0.0
    %876 = vmatprep.subr.mxu0 0.0
    %877 = vmatpush1.msra.mxu0 0.0
    %878 = vmatprep.subr.mxu0 0.0
    %879 = vmatpush1.msra.mxu0 0.0
    %880 = vmatprep.subr.mxu0 0.0
    %881 = vmatpush1.msra.mxu0 0.0
    %882 = vmatprep.subr.mxu0 0.0
    %883 = vmatpush1.msra.mxu0 0.0
    %884 = vmatprep.subr.mxu0 0.0
    %885 = vmatpush1.msra.mxu0 0.0
    %886 = vmatprep.subr.mxu0 0.0
    %887 = vmatpush1.msra.mxu0 0.0
    %888 = vmatprep.subr.mxu0 0.0
    %889 = vmatpush1.msra.mxu0 0.0
    %890 = vmatprep.mubr.f32.mxu0 0.0
    %891 = vmatmul.mubr.f32.gmra.mrb[0].mxu0 %v698
    %v892 = vpop.f32.mrb[0].mxu0
    %v893 = vadd.f32 0.0, %v892
    %v894 = vpop.f32.mrb[0].mxu0
    %895 = vmatprep.mubr.f32.mxu0 0.0
    %896 = vmatmul.mubr.f32.gmra.mrb[0].mxu0 %v701
    %v897 = vpop.f32.mrb[0].mxu0
    %v898 = vadd.f32 0.0, %v897
    %v899 = vpop.f32.mrb[0].mxu0
    %900 = vmatprep.mubr.f32.mxu0 0.0
    %901 = vmatmul.mubr.f32.gmra.mrb[0].mxu0 %v704
    %v902 = vpop.f32.mrb[0].mxu0
    %v903 = vadd.f32 0.0, %v902
    %v904 = vpop.f32.mrb[0].mxu0
    %905 = vmatprep.mubr.f32.mxu0 0.0
    %906 = vmatmul.mubr.f32.gmra.mrb[0].mxu0 %v707
    %v907 = vpop.f32.mrb[0].mxu0
    %v908 = vadd.f32 0.0, %v907
    %v909 = vpop.f32.mrb[0].mxu0
    %910 = vmatprep.mubr.f32.mxu0 0.0
    %911 = vmatmul.mubr.f32.gmra.mrb[0].mxu0 %v710
    %v912 = vpop.f32.mrb[0].mxu0
    %v913 = vadd.f32 0.0, %v912
    %v914 = vpop.f32.mrb[0].mxu0
    %915 = vmatprep.mubr.f32.mxu0 0.0
    %916 = vmatmul.mubr.f32.gmra.mrb[0].mxu0 %v713
    %v917 = vpop.f32.mrb[0].mxu0
    %v918 = vadd.f32 0.0, %v917
    %v919 = vpop.f32.mrb[0].mxu0
    %920 = vmatprep.mubr.f32.mxu0 0.0
    %921 = vmatmul.mubr.f32.gmra.mrb[0].mxu0 %v716
    %v922 = vpop.f32.mrb[0].mxu0
    %v923 = vadd.f32 0.0, %v922
    %v924 = vpop.f32.mrb[0].mxu0
    %925 = vmatprep.mubr.f32.mxu0 0.0
    %926 = vmatmul.mubr.f32.gmra.mrb[0].mxu0 %v719
    %v927 = vpop.f32.mrb[0].mxu0
    %v928 = vadd.f32 0.0, %v927
    %v929 = vpop.f32.mrb[0].mxu0
    %930 = vdwg.mxu0
    %931 = vmatprep.subr.mxu0 0.0
    %932 = vmatpush1.msra.mxu0 %v115
    %933 = vmatprep.subr.mxu0 0.0
    %934 = vmatpush1.msra.mxu0 %v116
    %935 = vmatprep.subr.mxu0 0.0
    %936 = vmatpush1.msra.mxu0 %v117
    %937 = vmatprep.subr.mxu0 0.0
    %938 = vmatpush1.msra.mxu0 %v118
    %939 = vmatprep.subr.mxu0 0.0
    %940 = vmatpush1.msra.mxu0 %v119
    %941 = vmatprep.subr.mxu0 0.0
    %942 = vmatpush1.msra.mxu0 %v120
    %943 = vmatprep.subr.mxu0 0.0
    %944 = vmatpush1.msra.mxu0 %v457
    %945 = vmatprep.subr.mxu0 0.0
    %946 = vmatpush1.msra.mxu0 0.0
    %947 = vmatprep.subr.mxu0 0.0
    %948 = vmatpush1.msra.mxu0 0.0
    %949 = vmatprep.subr.mxu0 0.0
    %950 = vmatpush1.msra.mxu0 0.0
    %951 = vmatprep.subr.mxu0 0.0
    %952 = vmatpush1.msra.mxu0 0.0
    %953 = vmatprep.subr.mxu0 0.0
    %954 = vmatpush1.msra.mxu0 0.0
    %955 = vmatprep.subr.mxu0 0.0
    %956 = vmatpush1.msra.mxu0 0.0
    %957 = vmatprep.subr.mxu0 0.0
    %958 = vmatpush1.msra.mxu0 0.0
    %959 = vmatprep.subr.mxu0 0.0
    %960 = vmatpush1.msra.mxu0 0.0
    %961 = vmatprep.subr.mxu0 0.0
    %962 = vmatpush1.msra.mxu0 0.0
    %963 = vmatprep.subr.mxu0 0.0
    %964 = vmatpush1.msra.mxu0 0.0
    %965 = vmatprep.subr.mxu0 0.0
    %966 = vmatpush1.msra.mxu0 0.0
    %967 = vmatprep.subr.mxu0 0.0
    %968 = vmatpush1.msra.mxu0 0.0
    %969 = vmatprep.subr.mxu0 0.0
    %970 = vmatpush1.msra.mxu0 0.0
    %971 = vmatprep.subr.mxu0 0.0
    %972 = vmatpush1.msra.mxu0 0.0
    %973 = vmatprep.subr.mxu0 0.0
    %974 = vmatpush1.msra.mxu0 0.0
    %975 = vmatprep.subr.mxu0 0.0
    %976 = vmatpush1.msra.mxu0 0.0
    %977 = vmatprep.subr.mxu0 0.0
    %978 = vmatpush1.msra.mxu0 0.0
    %979 = vmatprep.subr.mxu0 0.0
    %980 = vmatpush1.msra.mxu0 0.0
    %981 = vmatprep.subr.mxu0 0.0
    %982 = vmatpush1.msra.mxu0 0.0
    %983 = vmatprep.subr.mxu0 0.0
    %984 = vmatpush1.msra.mxu0 0.0
    %985 = vmatprep.subr.mxu0 0.0
    %986 = vmatpush1.msra.mxu0 0.0
    %987 = vmatprep.subr.mxu0 0.0
    %988 = vmatpush1.msra.mxu0 0.0
    %989 = vmatprep.subr.mxu0 0.0
    %990 = vmatpush1.msra.mxu0 0.0
    %991 = vmatprep.subr.mxu0 0.0
    %992 = vmatpush1.msra.mxu0 0.0
    %993 = vmatprep.subr.mxu0 0.0
    %994 = vmatpush1.msra.mxu0 0.0
    %995 = vmatprep.mubr.f32.mxu0 0.0
    %996 = vmatmul.mubr.f32.gmra.mrb[0].mxu0 %v698
    %v997 = vpop.f32.mrb[0].mxu0
    %v998 = vadd.f32 0.0, %v997
    %v999 = vpop.f32.mrb[0].mxu0
    %1000 = vmatprep.mubr.f32.mxu0 0.0
    %1001 = vmatmul.mubr.f32.gmra.mrb[0].mxu0 %v701
    %v1002 = vpop.f32.mrb[0].mxu0
    %v1003 = vadd.f32 0.0, %v1002
    %v1004 = vpop.f32.mrb[0].mxu0
    %1005 = vmatprep.mubr.f32.mxu0 0.0
    %1006 = vmatmul.mubr.f32.gmra.mrb[0].mxu0 %v704
    %v1007 = vpop.f32.mrb[0].mxu0
    %v1008 = vadd.f32 0.0, %v1007
    %v1009 = vpop.f32.mrb[0].mxu0
    %1010 = vmatprep.mubr.f32.mxu0 0.0
    %1011 = vmatmul.mubr.f32.gmra.mrb[0].mxu0 %v707
    %v1012 = vpop.f32.mrb[0].mxu0
    %v1013 = vadd.f32 0.0, %v1012
    %v1014 = vpop.f32.mrb[0].mxu0
    %1015 = vmatprep.mubr.f32.mxu0 0.0
    %1016 = vmatmul.mubr.f32.gmra.mrb[0].mxu0 %v710
    %v1017 = vpop.f32.mrb[0].mxu0
    %v1018 = vadd.f32 0.0, %v1017
    %v1019 = vpop.f32.mrb[0].mxu0
    %1020 = vmatprep.mubr.f32.mxu0 0.0
    %1021 = vmatmul.mubr.f32.gmra.mrb[0].mxu0 %v713
    %v1022 = vpop.f32.mrb[0].mxu0
    %v1023 = vadd.f32 0.0, %v1022
    %v1024 = vpop.f32.mrb[0].mxu0
    %1025 = vmatprep.mubr.f32.mxu0 0.0
    %1026 = vmatmul.mubr.f32.gmra.mrb[0].mxu0 %v716
    %v1027 = vpop.f32.mrb[0].mxu0
    %v1028 = vadd.f32 0.0, %v1027
    %v1029 = vpop.f32.mrb[0].mxu0
    %1030 = vmatprep.mubr.f32.mxu0 0.0
    %1031 = vmatmul.mubr.f32.gmra.mrb[0].mxu0 %v719
    %v1032 = vpop.f32.mrb[0].mxu0
    %v1033 = vadd.f32 0.0, %v1032
    %v1034 = vpop.f32.mrb[0].mxu0
    %1035 = vdwg.mxu0
    %v1037 = vlaneseq
    %v1038 = vshrl.u32 %v1037, 7
    %v1039 = vsub.s32 0, %v1038
    %v1040 = vrot.slane %v142, %v1039
    %1041 = vset.pattern.permute.xlu0 0
    %1042 = vperm.xlu0 %1041, %v1040
    %v1043 = vpop.permute.xlu0 %1042
    %1045 = vmatprep.subr.mxu0 0.0
    %1046 = vmatpush1.msra.mxu0 %v689
    %1047 = vmatprep.subr.mxu0 0.0
    %1048 = vmatpush1.msra.mxu0 %v690
    %1049 = vmatprep.subr.mxu0 0.0
    %1050 = vmatpush1.msra.mxu0 %v691
    %1051 = vmatprep.subr.mxu0 0.0
    %1052 = vmatpush1.msra.mxu0 %v692
    %1053 = vmatprep.subr.mxu0 0.0
    %1054 = vmatpush1.msra.mxu0 %v693
    %1055 = vmatprep.subr.mxu0 0.0
    %1056 = vmatpush1.msra.mxu0 %v694
    %1057 = vmatprep.subr.mxu0 0.0
    %1058 = vmatpush1.msra.mxu0 %v695
    %1059 = vmatprep.subr.mxu0 0.0
    %1060 = vmatpush1.msra.mxu0 %v696
    %1061 = vmatprep.subr.mxu0 0.0
    %1062 = vmatpush1.msra.mxu0 %v788
    %1063 = vmatprep.subr.mxu0 0.0
    %1064 = vmatpush1.msra.mxu0 %v793
    %1065 = vmatprep.subr.mxu0 0.0
    %1066 = vmatpush1.msra.mxu0 %v798
    %1067 = vmatprep.subr.mxu0 0.0
    %1068 = vmatpush1.msra.mxu0 %v803
    %1069 = vmatprep.subr.mxu0 0.0
    %1070 = vmatpush1.msra.mxu0 %v808
    %1071 = vmatprep.subr.mxu0 0.0
    %1072 = vmatpush1.msra.mxu0 %v813
    %1073 = vmatprep.subr.mxu0 0.0
    %1074 = vmatpush1.msra.mxu0 %v818
    %1075 = vmatprep.subr.mxu0 0.0
    %1076 = vmatpush1.msra.mxu0 %v823
    %1077 = vmatprep.subr.mxu0 0.0
    %1078 = vmatpush1.msra.mxu0 %v893
    %1079 = vmatprep.subr.mxu0 0.0
    %1080 = vmatpush1.msra.mxu0 %v898
    %1081 = vmatprep.subr.mxu0 0.0
    %1082 = vmatpush1.msra.mxu0 %v903
    %1083 = vmatprep.subr.mxu0 0.0
    %1084 = vmatpush1.msra.mxu0 %v908
    %1085 = vmatprep.subr.mxu0 0.0
    %1086 = vmatpush1.msra.mxu0 %v913
    %1087 = vmatprep.subr.mxu0 0.0
    %1088 = vmatpush1.msra.mxu0 %v918
    %1089 = vmatprep.subr.mxu0 0.0
    %1090 = vmatpush1.msra.mxu0 %v923
    %1091 = vmatprep.subr.mxu0 0.0
    %1092 = vmatpush1.msra.mxu0 %v928
    %1093 = vmatprep.subr.mxu0 0.0
    %1094 = vmatpush1.msra.mxu0 %v998
    %1095 = vmatprep.subr.mxu0 0.0
    %1096 = vmatpush1.msra.mxu0 %v1003
    %1097 = vmatprep.subr.mxu0 0.0
    %1098 = vmatpush1.msra.mxu0 %v1008
    %1099 = vmatprep.subr.mxu0 0.0
    %1100 = vmatpush1.msra.mxu0 %v1013
    %1101 = vmatprep.subr.mxu0 0.0
    %1102 = vmatpush1.msra.mxu0 %v1018
    %1103 = vmatprep.subr.mxu0 0.0
    %1104 = vmatpush1.msra.mxu0 %v1023
    %1105 = vmatprep.subr.mxu0 0.0
    %1106 = vmatpush1.msra.mxu0 %v1028
    %1107 = vmatprep.subr.mxu0 0.0
    %1108 = vmatpush1.msra.mxu0 %v1033
    %1109 = vmatprep.mubr.f32.mxu0 %v139
    %1110 = vmatmul.mubr.f32.gmra.mrb[0].mxu0 %v138
    %v1111 = vpop.f32.mrb[0].mxu0
    %v1112 = vadd.f32 %v1043, %v1111
    %v1113 = vpop.f32.mrb[0].mxu0
    %1114 = vmatprep.mubr.f32.mxu0 %v141
    %1115 = vmatmul.mubr.f32.gmra.mrb[0].mxu0 %v140
    %v1116 = vpop.f32.mrb[0].mxu0
    %v1117 = vadd.f32 %v1043, %v1116
    %v1118 = vpop.f32.mrb[0].mxu0
    %1119 = vdwg.mxu0
    %v1120 = vxor.u32 %v1112, 2147483648
    %v1121 = vxor.u32 %v1117, 2147483648
    %v1122 = vmul.f32 %v1120, 1.442695
    %v1123 = vpow.pop %v1122
    %v1124 = vmul.f32 %v1121, 1.442695
    %v1125 = vpow.pop %v1124
    %v1126 = vadd.f32 %v1123, 1.0
    %v1127 = vadd.f32 %v1125, 1.0
    %v1128 = vrcp.pop %v1126
    %v1129 = vmul.f32 1.0, %v1128
    %v1130 = vrcp.pop %v1127
    %v1131 = vmul.f32 1.0, %v1130
    %1132 = vst.msk [vmem:[%s8] sm:$0xff] %vm266, %v1129
    %1133 = vst.msk [vmem:[%s8 + $0x8] sm:$0xff] %vm266, %v1131
    %s1134 = sld [smem:[#allocation3 + $0x80]]
    %v1135 = vld [vmem:[#allocation6] sm:$0xff]
    %v1136 = vld [vmem:[#allocation6 + $0x8] sm:$0xff]
    %v1137 = vld [vmem:[#allocation6 + $0x10] sm:$0xff]
    %v1138 = vld [vmem:[#allocation6 + $0x18] sm:$0xff]
    %v1139 = vstv %s1134
    %v1140 = vmul.f32 %v1139, %v1135
    %v1141 = vmul.f32 %v1139, %v1136
    %v1142 = vmul.f32 %v1139, %v1137
    %v1143 = vmul.f32 %v1139, %v1138
    %v1144 = vadd.f32 %v143, %v1140
    %v1145 = vadd.f32 %v144, %v1141
    %v1146 = vadd.f32 %v145, %v1142
    %v1147 = vadd.f32 %v146, %v1143
    %s1148 = sld [smem:[#allocation3 + $0x81]]
    %v1149 = vld [vmem:[%s162] sm:$0xff]
    %v1150 = vld [vmem:[%s162 + $0x8] sm:$0xff]
    %v1151 = vld [vmem:[%s162 + $0x10] sm:$0xff]
    %v1152 = vld [vmem:[%s162 + $0x18] sm:$0xff]
    %v1153 = vstv %s1148
    %v1154 = vmul.f32 %v1153, %v1149
    %v1155 = vmul.f32 %v1153, %v1150
    %v1156 = vmul.f32 %v1153, %v1151
    %v1157 = vmul.f32 %v1153, %v1152
    %v1158 = vadd.f32 %v1144, %v1154
    %v1159 = vadd.f32 %v1145, %v1155
    %v1160 = vadd.f32 %v1146, %v1156
    %v1161 = vadd.f32 %v1147, %v1157
    %s1162 = sld [smem:[#allocation3 + $0x82]]
    %v1163 = vld [vmem:[%s177] sm:$0xff]
    %v1164 = vld [vmem:[%s177 + $0x8] sm:$0xff]
    %v1165 = vld [vmem:[%s177 + $0x10] sm:$0xff]
    %v1166 = vld [vmem:[%s177 + $0x18] sm:$0xff]
    %v1167 = vstv %s1162
    %v1168 = vmul.f32 %v1167, %v1163
    %v1169 = vmul.f32 %v1167, %v1164
    %v1170 = vmul.f32 %v1167, %v1165
    %v1171 = vmul.f32 %v1167, %v1166
    %v1172 = vadd.f32 %v1158, %v1168
    %v1173 = vadd.f32 %v1159, %v1169
    %v1174 = vadd.f32 %v1160, %v1170
    %v1175 = vadd.f32 %v1161, %v1171
    %s1176 = sld [smem:[#allocation3 + $0x83]]
    %v1177 = vld [vmem:[%s192] sm:$0xff]
    %v1178 = vld [vmem:[%s192 + $0x8] sm:$0xff]
    %v1179 = vld [vmem:[%s192 + $0x10] sm:$0xff]
    %v1180 = vld [vmem:[%s192 + $0x18] sm:$0xff]
    %v1181 = vstv %s1176
    %v1182 = vmul.f32 %v1181, %v1177
    %v1183 = vmul.f32 %v1181, %v1178
    %v1184 = vmul.f32 %v1181, %v1179
    %v1185 = vmul.f32 %v1181, %v1180
    %v1186 = vadd.f32 %v1172, %v1182
    %v1187 = vadd.f32 %v1173, %v1183
    %v1188 = vadd.f32 %v1174, %v1184
    %v1189 = vadd.f32 %v1175, %v1185
    %s1190 = sld [smem:[#allocation3 + $0x84]]
    %v1191 = vld [vmem:[%s207] sm:$0xff]
    %v1192 = vld [vmem:[%s207 + $0x8] sm:$0xff]
    %v1193 = vld [vmem:[%s207 + $0x10] sm:$0xff]
    %v1194 = vld [vmem:[%s207 + $0x18] sm:$0xff]
    %v1195 = vstv %s1190
    %v1196 = vmul.f32 %v1195, %v1191
    %v1197 = vmul.f32 %v1195, %v1192
    %v1198 = vmul.f32 %v1195, %v1193
    %v1199 = vmul.f32 %v1195, %v1194
    %v1200 = vadd.f32 %v1186, %v1196
    %v1201 = vadd.f32 %v1187, %v1197
    %v1202 = vadd.f32 %v1188, %v1198
    %v1203 = vadd.f32 %v1189, %v1199
    %s1204 = sld [smem:[#allocation3 + $0x85]]
    %v1205 = vld [vmem:[%s222] sm:$0xff]
    %v1206 = vld [vmem:[%s222 + $0x8] sm:$0xff]
    %v1207 = vld [vmem:[%s222 + $0x10] sm:$0xff]
    %v1208 = vld [vmem:[%s222 + $0x18] sm:$0xff]
    %v1209 = vstv %s1204
    %v1210 = vmul.f32 %v1209, %v1205
    %v1211 = vmul.f32 %v1209, %v1206
    %v1212 = vmul.f32 %v1209, %v1207
    %v1213 = vmul.f32 %v1209, %v1208
    %v1214 = vadd.f32 %v1200, %v1210
    %v1215 = vadd.f32 %v1201, %v1211
    %v1216 = vadd.f32 %v1202, %v1212
    %v1217 = vadd.f32 %v1203, %v1213
    %s1218 = sld [smem:[#allocation3 + $0x86]]
    %v1219 = vld [vmem:[%s237] sm:$0xff]
    %v1220 = vld [vmem:[%s237 + $0x8] sm:$0xff]
    %v1221 = vld [vmem:[%s237 + $0x10] sm:$0xff]
    %v1222 = vld [vmem:[%s237 + $0x18] sm:$0xff]
    %v1223 = vstv %s1218
    %v1224 = vmul.f32 %v1223, %v1219
    %v1225 = vmul.f32 %v1223, %v1220
    %v1226 = vmul.f32 %v1223, %v1221
    %v1227 = vmul.f32 %v1223, %v1222
    %v1228 = vadd.f32 %v1214, %v1224
    %v1229 = vadd.f32 %v1215, %v1225
    %v1230 = vadd.f32 %v1216, %v1226
    %v1231 = vadd.f32 %v1217, %v1227
    %s1232 = sld [smem:[#allocation3 + $0x87]]
    %v1233 = vld [vmem:[%s252] sm:$0xff]
    %v1234 = vld [vmem:[%s252 + $0x8] sm:$0xff]
    %v1235 = vld [vmem:[%s252 + $0x10] sm:$0xff]
    %v1236 = vld [vmem:[%s252 + $0x18] sm:$0xff]
    %v1237 = vstv %s1232
    %v1238 = vmul.f32 %v1237, %v1233
    %v1239 = vmul.f32 %v1237, %v1234
    %v1240 = vmul.f32 %v1237, %v1235
    %v1241 = vmul.f32 %v1237, %v1236
    %v1242 = vadd.f32 %v1228, %v1238
    %v1243 = vadd.f32 %v1229, %v1239
    %v1244 = vadd.f32 %v1230, %v1240
    %v1245 = vadd.f32 %v1231, %v1241
    %v1247 = vsel %vm266, %v1242, 0
    %v1250 = vsel %vm266, %v1243, 0
    %v1253 = vsel %vm266, %v1244, 0
    %v1256 = vsel %vm266, %v1245, 0
    %1258 = vmatprep.subr.mxu0 0.0
    %1259 = vmatpush1.msra.mxu0 %v99
    %1260 = vmatprep.subr.mxu0 0.0
    %1261 = vmatpush1.msra.mxu0 %v100
    %1262 = vmatprep.subr.mxu0 0.0
    %1263 = vmatpush1.msra.mxu0 %v101
    %1264 = vmatprep.subr.mxu0 0.0
    %1265 = vmatpush1.msra.mxu0 %v102
    %1266 = vmatprep.subr.mxu0 0.0
    %1267 = vmatpush1.msra.mxu0 %v103
    %1268 = vmatprep.subr.mxu0 0.0
    %1269 = vmatpush1.msra.mxu0 %v104
    %1270 = vmatprep.subr.mxu0 0.0
    %1271 = vmatpush1.msra.mxu0 %v281
    %1272 = vmatprep.subr.mxu0 0.0
    %1273 = vmatpush1.msra.mxu0 0.0
    %1274 = vmatprep.subr.mxu0 0.0
    %1275 = vmatpush1.msra.mxu0 0.0
    %1276 = vmatprep.subr.mxu0 0.0
    %1277 = vmatpush1.msra.mxu0 0.0
    %1278 = vmatprep.subr.mxu0 0.0
    %1279 = vmatpush1.msra.mxu0 0.0
    %1280 = vmatprep.subr.mxu0 0.0
    %1281 = vmatpush1.msra.mxu0 0.0
    %1282 = vmatprep.subr.mxu0 0.0
    %1283 = vmatpush1.msra.mxu0 0.0
    %1284 = vmatprep.subr.mxu0 0.0
    %1285 = vmatpush1.msra.mxu0 0.0
    %1286 = vmatprep.subr.mxu0 0.0
    %1287 = vmatpush1.msra.mxu0 0.0
    %1288 = vmatprep.subr.mxu0 0.0
    %1289 = vmatpush1.msra.mxu0 0.0
    %1290 = vmatprep.subr.mxu0 0.0
    %1291 = vmatpush1.msra.mxu0 0.0
    %1292 = vmatprep.subr.mxu0 0.0
    %1293 = vmatpush1.msra.mxu0 0.0
    %1294 = vmatprep.subr.mxu0 0.0
    %1295 = vmatpush1.msra.mxu0 0.0
    %1296 = vmatprep.subr.mxu0 0.0
    %1297 = vmatpush1.msra.mxu0 0.0
    %1298 = vmatprep.subr.mxu0 0.0
    %1299 = vmatpush1.msra.mxu0 0.0
    %1300 = vmatprep.subr.mxu0 0.0
    %1301 = vmatpush1.msra.mxu0 0.0
    %1302 = vmatprep.subr.mxu0 0.0
    %1303 = vmatpush1.msra.mxu0 0.0
    %1304 = vmatprep.subr.mxu0 0.0
    %1305 = vmatpush1.msra.mxu0 0.0
    %1306 = vmatprep.subr.mxu0 0.0
    %1307 = vmatpush1.msra.mxu0 0.0
    %1308 = vmatprep.subr.mxu0 0.0
    %1309 = vmatpush1.msra.mxu0 0.0
    %1310 = vmatprep.subr.mxu0 0.0
    %1311 = vmatpush1.msra.mxu0 0.0
    %1312 = vmatprep.subr.mxu0 0.0
    %1313 = vmatpush1.msra.mxu0 0.0
    %1314 = vmatprep.subr.mxu0 0.0
    %1315 = vmatpush1.msra.mxu0 0.0
    %1316 = vmatprep.subr.mxu0 0.0
    %1317 = vmatpush1.msra.mxu0 0.0
    %1318 = vmatprep.subr.mxu0 0.0
    %1319 = vmatpush1.msra.mxu0 0.0
    %1320 = vmatprep.subr.mxu0 0.0
    %1321 = vmatpush1.msra.mxu0 0.0
    %1322 = vmatprep.mubr.f32.mxu0 0.0
    %1323 = vmatmul.mubr.f32.gmra.mrb[0].mxu0 %v1247
    %v1324 = vpop.f32.mrb[0].mxu0
    %v1325 = vadd.f32 0.0, %v1324
    %v1326 = vpop.f32.mrb[0].mxu0
    %1327 = vmatprep.mubr.f32.mxu0 0.0
    %1328 = vmatmul.mubr.f32.gmra.mrb[0].mxu0 %v1250
    %v1329 = vpop.f32.mrb[0].mxu0
    %v1330 = vadd.f32 0.0, %v1329
    %v1331 = vpop.f32.mrb[0].mxu0
    %1332 = vmatprep.mubr.f32.mxu0 0.0
    %1333 = vmatmul.mubr.f32.gmra.mrb[0].mxu0 %v1253
    %v1334 = vpop.f32.mrb[0].mxu0
    %v1335 = vadd.f32 0.0, %v1334
    %v1336 = vpop.f32.mrb[0].mxu0
    %1337 = vmatprep.mubr.f32.mxu0 0.0
    %1338 = vmatmul.mubr.f32.gmra.mrb[0].mxu0 %v1256
    %v1339 = vpop.f32.mrb[0].mxu0
    %v1340 = vadd.f32 0.0, %v1339
    %v1341 = vpop.f32.mrb[0].mxu0
    %1342 = vdwg.mxu0
    %1343 = vmatprep.subr.mxu0 0.0
    %1344 = vmatpush1.msra.mxu0 %v107
    %1345 = vmatprep.subr.mxu0 0.0
    %1346 = vmatpush1.msra.mxu0 %v108
    %1347 = vmatprep.subr.mxu0 0.0
    %1348 = vmatpush1.msra.mxu0 %v109
    %1349 = vmatprep.subr.mxu0 0.0
    %1350 = vmatpush1.msra.mxu0 %v110
    %1351 = vmatprep.subr.mxu0 0.0
    %1352 = vmatpush1.msra.mxu0 %v111
    %1353 = vmatprep.subr.mxu0 0.0
    %1354 = vmatpush1.msra.mxu0 %v112
    %1355 = vmatprep.subr.mxu0 0.0
    %1356 = vmatpush1.msra.mxu0 %v369
    %1357 = vmatprep.subr.mxu0 0.0
    %1358 = vmatpush1.msra.mxu0 0.0
    %1359 = vmatprep.subr.mxu0 0.0
    %1360 = vmatpush1.msra.mxu0 0.0
    %1361 = vmatprep.subr.mxu0 0.0
    %1362 = vmatpush1.msra.mxu0 0.0
    %1363 = vmatprep.subr.mxu0 0.0
    %1364 = vmatpush1.msra.mxu0 0.0
    %1365 = vmatprep.subr.mxu0 0.0
    %1366 = vmatpush1.msra.mxu0 0.0
    %1367 = vmatprep.subr.mxu0 0.0
    %1368 = vmatpush1.msra.mxu0 0.0
    %1369 = vmatprep.subr.mxu0 0.0
    %1370 = vmatpush1.msra.mxu0 0.0
    %1371 = vmatprep.subr.mxu0 0.0
    %1372 = vmatpush1.msra.mxu0 0.0
    %1373 = vmatprep.subr.mxu0 0.0
    %1374 = vmatpush1.msra.mxu0 0.0
    %1375 = vmatprep.subr.mxu0 0.0
    %1376 = vmatpush1.msra.mxu0 0.0
    %1377 = vmatprep.subr.mxu0 0.0
    %1378 = vmatpush1.msra.mxu0 0.0
    %1379 = vmatprep.subr.mxu0 0.0
    %1380 = vmatpush1.msra.mxu0 0.0
    %1381 = vmatprep.subr.mxu0 0.0
    %1382 = vmatpush1.msra.mxu0 0.0
    %1383 = vmatprep.subr.mxu0 0.0
    %1384 = vmatpush1.msra.mxu0 0.0
    %1385 = vmatprep.subr.mxu0 0.0
    %1386 = vmatpush1.msra.mxu0 0.0
    %1387 = vmatprep.subr.mxu0 0.0
    %1388 = vmatpush1.msra.mxu0 0.0
    %1389 = vmatprep.subr.mxu0 0.0
    %1390 = vmatpush1.msra.mxu0 0.0
    %1391 = vmatprep.subr.mxu0 0.0
    %1392 = vmatpush1.msra.mxu0 0.0
    %1393 = vmatprep.subr.mxu0 0.0
    %1394 = vmatpush1.msra.mxu0 0.0
    %1395 = vmatprep.subr.mxu0 0.0
    %1396 = vmatpush1.msra.mxu0 0.0
    %1397 = vmatprep.subr.mxu0 0.0
    %1398 = vmatpush1.msra.mxu0 0.0
    %1399 = vmatprep.subr.mxu0 0.0
    %1400 = vmatpush1.msra.mxu0 0.0
    %1401 = vmatprep.subr.mxu0 0.0
    %1402 = vmatpush1.msra.mxu0 0.0
    %1403 = vmatprep.subr.mxu0 0.0
    %1404 = vmatpush1.msra.mxu0 0.0
    %1405 = vmatprep.subr.mxu0 0.0
    %1406 = vmatpush1.msra.mxu0 0.0
    %1407 = vmatprep.mubr.f32.mxu0 0.0
    %1408 = vmatmul.mubr.f32.gmra.mrb[0].mxu0 %v1247
    %v1409 = vpop.f32.mrb[0].mxu0
    %v1410 = vadd.f32 0.0, %v1409
    %v1411 = vpop.f32.mrb[0].mxu0
    %1412 = vmatprep.mubr.f32.mxu0 0.0
    %1413 = vmatmul.mubr.f32.gmra.mrb[0].mxu0 %v1250
    %v1414 = vpop.f32.mrb[0].mxu0
    %v1415 = vadd.f32 0.0, %v1414
    %v1416 = vpop.f32.mrb[0].mxu0
    %1417 = vmatprep.mubr.f32.mxu0 0.0
    %1418 = vmatmul.mubr.f32.gmra.mrb[0].mxu0 %v1253
    %v1419 = vpop.f32.mrb[0].mxu0
    %v1420 = vadd.f32 0.0, %v1419
    %v1421 = vpop.f32.mrb[0].mxu0
    %1422 = vmatprep.mubr.f32.mxu0 0.0
    %1423 = vmatmul.mubr.f32.gmra.mrb[0].mxu0 %v1256
    %v1424 = vpop.f32.mrb[0].mxu0
    %v1425 = vadd.f32 0.0, %v1424
    %v1426 = vpop.f32.mrb[0].mxu0
    %1427 = vdwg.mxu0
    %1428 = vmatprep.subr.mxu0 0.0
    %1429 = vmatpush1.msra.mxu0 %v115
    %1430 = vmatprep.subr.mxu0 0.0
    %1431 = vmatpush1.msra.mxu0 %v116
    %1432 = vmatprep.subr.mxu0 0.0
    %1433 = vmatpush1.msra.mxu0 %v117
    %1434 = vmatprep.subr.mxu0 0.0
    %1435 = vmatpush1.msra.mxu0 %v118
    %1436 = vmatprep.subr.mxu0 0.0
    %1437 = vmatpush1.msra.mxu0 %v119
    %1438 = vmatprep.subr.mxu0 0.0
    %1439 = vmatpush1.msra.mxu0 %v120
    %1440 = vmatprep.subr.mxu0 0.0
    %1441 = vmatpush1.msra.mxu0 %v457
    %1442 = vmatprep.subr.mxu0 0.0
    %1443 = vmatpush1.msra.mxu0 0.0
    %1444 = vmatprep.subr.mxu0 0.0
    %1445 = vmatpush1.msra.mxu0 0.0
    %1446 = vmatprep.subr.mxu0 0.0
    %1447 = vmatpush1.msra.mxu0 0.0
    %1448 = vmatprep.subr.mxu0 0.0
    %1449 = vmatpush1.msra.mxu0 0.0
    %1450 = vmatprep.subr.mxu0 0.0
    %1451 = vmatpush1.msra.mxu0 0.0
    %1452 = vmatprep.subr.mxu0 0.0
    %1453 = vmatpush1.msra.mxu0 0.0
    %1454 = vmatprep.subr.mxu0 0.0
    %1455 = vmatpush1.msra.mxu0 0.0
    %1456 = vmatprep.subr.mxu0 0.0
    %1457 = vmatpush1.msra.mxu0 0.0
    %1458 = vmatprep.subr.mxu0 0.0
    %1459 = vmatpush1.msra.mxu0 0.0
    %1460 = vmatprep.subr.mxu0 0.0
    %1461 = vmatpush1.msra.mxu0 0.0
    %1462 = vmatprep.subr.mxu0 0.0
    %1463 = vmatpush1.msra.mxu0 0.0
    %1464 = vmatprep.subr.mxu0 0.0
    %1465 = vmatpush1.msra.mxu0 0.0
    %1466 = vmatprep.subr.mxu0 0.0
    %1467 = vmatpush1.msra.mxu0 0.0
    %1468 = vmatprep.subr.mxu0 0.0
    %1469 = vmatpush1.msra.mxu0 0.0
    %1470 = vmatprep.subr.mxu0 0.0
    %1471 = vmatpush1.msra.mxu0 0.0
    %1472 = vmatprep.subr.mxu0 0.0
    %1473 = vmatpush1.msra.mxu0 0.0
    %1474 = vmatprep.subr.mxu0 0.0
    %1475 = vmatpush1.msra.mxu0 0.0
    %1476 = vmatprep.subr.mxu0 0.0
    %1477 = vmatpush1.msra.mxu0 0.0
    %1478 = vmatprep.subr.mxu0 0.0
    %1479 = vmatpush1.msra.mxu0 0.0
    %1480 = vmatprep.subr.mxu0 0.0
    %1481 = vmatpush1.msra.mxu0 0.0
    %1482 = vmatprep.subr.mxu0 0.0
    %1483 = vmatpush1.msra.mxu0 0.0
    %1484 = vmatprep.subr.mxu0 0.0
    %1485 = vmatpush1.msra.mxu0 0.0
    %1486 = vmatprep.subr.mxu0 0.0
    %1487 = vmatpush1.msra.mxu0 0.0
    %1488 = vmatprep.subr.mxu0 0.0
    %1489 = vmatpush1.msra.mxu0 0.0
    %1490 = vmatprep.subr.mxu0 0.0
    %1491 = vmatpush1.msra.mxu0 0.0
    %1492 = vmatprep.mubr.f32.mxu0 0.0
    %1493 = vmatmul.mubr.f32.gmra.mrb[0].mxu0 %v1247
    %v1494 = vpop.f32.mrb[0].mxu0
    %v1495 = vadd.f32 0.0, %v1494
    %v1496 = vpop.f32.mrb[0].mxu0
    %1497 = vmatprep.mubr.f32.mxu0 0.0
    %1498 = vmatmul.mubr.f32.gmra.mrb[0].mxu0 %v1250
    %v1499 = vpop.f32.mrb[0].mxu0
    %v1500 = vadd.f32 0.0, %v1499
    %v1501 = vpop.f32.mrb[0].mxu0
    %1502 = vmatprep.mubr.f32.mxu0 0.0
    %1503 = vmatmul.mubr.f32.gmra.mrb[0].mxu0 %v1253
    %v1504 = vpop.f32.mrb[0].mxu0
    %v1505 = vadd.f32 0.0, %v1504
    %v1506 = vpop.f32.mrb[0].mxu0
    %1507 = vmatprep.mubr.f32.mxu0 0.0
    %1508 = vmatmul.mubr.f32.gmra.mrb[0].mxu0 %v1256
    %v1509 = vpop.f32.mrb[0].mxu0
    %v1510 = vadd.f32 0.0, %v1509
    %v1511 = vpop.f32.mrb[0].mxu0
    %1512 = vdwg.mxu0
    %1513 = vmatprep.subr.mxu0 0.0
    %1514 = vmatpush1.msra.mxu0 %v1242
    %1515 = vmatprep.subr.mxu0 0.0
    %1516 = vmatpush1.msra.mxu0 %v1243
    %1517 = vmatprep.subr.mxu0 0.0
    %1518 = vmatpush1.msra.mxu0 %v1244
    %1519 = vmatprep.subr.mxu0 0.0
    %1520 = vmatpush1.msra.mxu0 %v1245
    %1521 = vmatprep.subr.mxu0 0.0
    %1522 = vmatpush1.msra.mxu0 %v1325
    %1523 = vmatprep.subr.mxu0 0.0
    %1524 = vmatpush1.msra.mxu0 %v1330
    %1525 = vmatprep.subr.mxu0 0.0
    %1526 = vmatpush1.msra.mxu0 %v1335
    %1527 = vmatprep.subr.mxu0 0.0
    %1528 = vmatpush1.msra.mxu0 %v1340
    %1529 = vmatprep.subr.mxu0 0.0
    %1530 = vmatpush1.msra.mxu0 %v1410
    %1531 = vmatprep.subr.mxu0 0.0
    %1532 = vmatpush1.msra.mxu0 %v1415
    %1533 = vmatprep.subr.mxu0 0.0
    %1534 = vmatpush1.msra.mxu0 %v1420
    %1535 = vmatprep.subr.mxu0 0.0
    %1536 = vmatpush1.msra.mxu0 %v1425
    %1537 = vmatprep.subr.mxu0 0.0
    %1538 = vmatpush1.msra.mxu0 %v1495
    %1539 = vmatprep.subr.mxu0 0.0
    %1540 = vmatpush1.msra.mxu0 %v1500
    %1541 = vmatprep.subr.mxu0 0.0
    %1542 = vmatpush1.msra.mxu0 %v1505
    %1543 = vmatprep.subr.mxu0 0.0
    %1544 = vmatpush1.msra.mxu0 %v1510
    %1545 = vmatprep.subr.mxu0 0.0
    %1546 = vmatpush1.msra.mxu0 0.0
    %1547 = vmatprep.subr.mxu0 0.0
    %1548 = vmatpush1.msra.mxu0 0.0
    %1549 = vmatprep.subr.mxu0 0.0
    %1550 = vmatpush1.msra.mxu0 0.0
    %1551 = vmatprep.subr.mxu0 0.0
    %1552 = vmatpush1.msra.mxu0 0.0
    %1553 = vmatprep.subr.mxu0 0.0
    %1554 = vmatpush1.msra.mxu0 0.0
    %1555 = vmatprep.subr.mxu0 0.0
    %1556 = vmatpush1.msra.mxu0 0.0
    %1557 = vmatprep.subr.mxu0 0.0
    %1558 = vmatpush1.msra.mxu0 0.0
    %1559 = vmatprep.subr.mxu0 0.0
    %1560 = vmatpush1.msra.mxu0 0.0
    %1561 = vmatprep.subr.mxu0 0.0
    %1562 = vmatpush1.msra.mxu0 0.0
    %1563 = vmatprep.subr.mxu0 0.0
    %1564 = vmatpush1.msra.mxu0 0.0
    %1565 = vmatprep.subr.mxu0 0.0
    %1566 = vmatpush1.msra.mxu0 0.0
    %1567 = vmatprep.subr.mxu0 0.0
    %1568 = vmatpush1.msra.mxu0 0.0
    %1569 = vmatprep.subr.mxu0 0.0
    %1570 = vmatpush1.msra.mxu0 0.0
    %1571 = vmatprep.subr.mxu0 0.0
    %1572 = vmatpush1.msra.mxu0 0.0
    %1573 = vmatprep.subr.mxu0 0.0
    %1574 = vmatpush1.msra.mxu0 0.0
    %1575 = vmatprep.subr.mxu0 0.0
    %1576 = vmatpush1.msra.mxu0 0.0
    %1577 = vmatprep.mubr.f32.mxu0 0.0
    %1578 = vmatmul.mubr.f32.gmra.mrb[0].mxu0 %v122
    %v1579 = vpop.f32.mrb[0].mxu0
    %v1580 = vadd.f32 %v547, %v1579
    %v1581 = vpop.f32.mrb[0].mxu0
    %1582 = vmatprep.mubr.f32.mxu0 0.0
    %1583 = vmatmul.mubr.f32.gmra.mrb[0].mxu0 %v123
    %v1584 = vpop.f32.mrb[0].mxu0
    %v1585 = vadd.f32 %v552, %v1584
    %v1586 = vpop.f32.mrb[0].mxu0
    %1587 = vmatprep.mubr.f32.mxu0 0.0
    %1588 = vmatmul.mubr.f32.gmra.mrb[0].mxu0 %v124
    %v1589 = vpop.f32.mrb[0].mxu0
    %v1590 = vadd.f32 %v557, %v1589
    %v1591 = vpop.f32.mrb[0].mxu0
    %1592 = vmatprep.mubr.f32.mxu0 0.0
    %1593 = vmatmul.mubr.f32.gmra.mrb[0].mxu0 %v125
    %v1594 = vpop.f32.mrb[0].mxu0
    %v1595 = vadd.f32 %v562, %v1594
    %v1596 = vpop.f32.mrb[0].mxu0
    %1597 = vmatprep.mubr.f32.mxu0 0.0
    %1598 = vmatmul.mubr.f32.gmra.mrb[0].mxu0 %v126
    %v1599 = vpop.f32.mrb[0].mxu0
    %v1600 = vadd.f32 %v567, %v1599
    %v1601 = vpop.f32.mrb[0].mxu0
    %1602 = vmatprep.mubr.f32.mxu0 0.0
    %1603 = vmatmul.mubr.f32.gmra.mrb[0].mxu0 %v127
    %v1604 = vpop.f32.mrb[0].mxu0
    %v1605 = vadd.f32 %v572, %v1604
    %v1606 = vpop.f32.mrb[0].mxu0
    %1607 = vmatprep.mubr.f32.mxu0 0.0
    %1608 = vmatmul.mubr.f32.gmra.mrb[0].mxu0 %v128
    %v1609 = vpop.f32.mrb[0].mxu0
    %v1610 = vadd.f32 %v577, %v1609
    %v1611 = vpop.f32.mrb[0].mxu0
    %1612 = vmatprep.mubr.f32.mxu0 0.0
    %1613 = vmatmul.mubr.f32.gmra.mrb[0].mxu0 %v129
    %v1614 = vpop.f32.mrb[0].mxu0
    %v1615 = vadd.f32 %v582, %v1614
    %v1616 = vpop.f32.mrb[0].mxu0
    %1617 = vdwg.mxu0
    %v1618 = vmax.f32 %v1580, 0.0
    %v1619 = vmax.f32 %v1585, 0.0
    %v1620 = vmax.f32 %v1590, 0.0
    %v1621 = vmax.f32 %v1595, 0.0
    %v1622 = vmax.f32 %v1600, 0.0
    %v1623 = vmax.f32 %v1605, 0.0
    %v1624 = vmax.f32 %v1610, 0.0
    %v1625 = vmax.f32 %v1615, 0.0
    %v1627 = vsel %vm266, %v1618, 0
    %v1630 = vsel %vm266, %v1619, 0
    %v1633 = vsel %vm266, %v1620, 0
    %v1636 = vsel %vm266, %v1621, 0
    %v1639 = vsel %vm266, %v1622, 0
    %v1642 = vsel %vm266, %v1623, 0
    %v1645 = vsel %vm266, %v1624, 0
    %v1648 = vsel %vm266, %v1625, 0
    %1650 = vmatprep.subr.mxu0 0.0
    %1651 = vmatpush1.msra.mxu0 %v99
    %1652 = vmatprep.subr.mxu0 0.0
    %1653 = vmatpush1.msra.mxu0 %v100
    %1654 = vmatprep.subr.mxu0 0.0
    %1655 = vmatpush1.msra.mxu0 %v101
    %1656 = vmatprep.subr.mxu0 0.0
    %1657 = vmatpush1.msra.mxu0 %v102
    %1658 = vmatprep.subr.mxu0 0.0
    %1659 = vmatpush1.msra.mxu0 %v103
    %1660 = vmatprep.subr.mxu0 0.0
    %1661 = vmatpush1.msra.mxu0 %v104
    %1662 = vmatprep.subr.mxu0 0.0
    %1663 = vmatpush1.msra.mxu0 %v281
    %1664 = vmatprep.subr.mxu0 0.0
    %1665 = vmatpush1.msra.mxu0 0.0
    %1666 = vmatprep.subr.mxu0 0.0
    %1667 = vmatpush1.msra.mxu0 0.0
    %1668 = vmatprep.subr.mxu0 0.0
    %1669 = vmatpush1.msra.mxu0 0.0
    %1670 = vmatprep.subr.mxu0 0.0
    %1671 = vmatpush1.msra.mxu0 0.0
    %1672 = vmatprep.subr.mxu0 0.0
    %1673 = vmatpush1.msra.mxu0 0.0
    %1674 = vmatprep.subr.mxu0 0.0
    %1675 = vmatpush1.msra.mxu0 0.0
    %1676 = vmatprep.subr.mxu0 0.0
    %1677 = vmatpush1.msra.mxu0 0.0
    %1678 = vmatprep.subr.mxu0 0.0
    %1679 = vmatpush1.msra.mxu0 0.0
    %1680 = vmatprep.subr.mxu0 0.0
    %1681 = vmatpush1.msra.mxu0 0.0
    %1682 = vmatprep.subr.mxu0 0.0
    %1683 = vmatpush1.msra.mxu0 0.0
    %1684 = vmatprep.subr.mxu0 0.0
    %1685 = vmatpush1.msra.mxu0 0.0
    %1686 = vmatprep.subr.mxu0 0.0
    %1687 = vmatpush1.msra.mxu0 0.0
    %1688 = vmatprep.subr.mxu0 0.0
    %1689 = vmatpush1.msra.mxu0 0.0
    %1690 = vmatprep.subr.mxu0 0.0
    %1691 = vmatpush1.msra.mxu0 0.0
    %1692 = vmatprep.subr.mxu0 0.0
    %1693 = vmatpush1.msra.mxu0 0.0
    %1694 = vmatprep.subr.mxu0 0.0
    %1695 = vmatpush1.msra.mxu0 0.0
    %1696 = vmatprep.subr.mxu0 0.0
    %1697 = vmatpush1.msra.mxu0 0.0
    %1698 = vmatprep.subr.mxu0 0.0
    %1699 = vmatpush1.msra.mxu0 0.0
    %1700 = vmatprep.subr.mxu0 0.0
    %1701 = vmatpush1.msra.mxu0 0.0
    %1702 = vmatprep.subr.mxu0 0.0
    %1703 = vmatpush1.msra.mxu0 0.0
    %1704 = vmatprep.subr.mxu0 0.0
    %1705 = vmatpush1.msra.mxu0 0.0
    %1706 = vmatprep.subr.mxu0 0.0
    %1707 = vmatpush1.msra.mxu0 0.0
    %1708 = vmatprep.subr.mxu0 0.0
    %1709 = vmatpush1.msra.mxu0 0.0
    %1710 = vmatprep.subr.mxu0 0.0
    %1711 = vmatpush1.msra.mxu0 0.0
    %1712 = vmatprep.subr.mxu0 0.0
    %1713 = vmatpush1.msra.mxu0 0.0
    %1714 = vmatprep.mubr.f32.mxu0 0.0
    %1715 = vmatmul.mubr.f32.gmra.mrb[0].mxu0 %v1627
    %v1716 = vpop.f32.mrb[0].mxu0
    %v1717 = vadd.f32 0.0, %v1716
    %v1718 = vpop.f32.mrb[0].mxu0
    %1719 = vmatprep.mubr.f32.mxu0 0.0
    %1720 = vmatmul.mubr.f32.gmra.mrb[0].mxu0 %v1630
    %v1721 = vpop.f32.mrb[0].mxu0
    %v1722 = vadd.f32 0.0, %v1721
    %v1723 = vpop.f32.mrb[0].mxu0
    %1724 = vmatprep.mubr.f32.mxu0 0.0
    %1725 = vmatmul.mubr.f32.gmra.mrb[0].mxu0 %v1633
    %v1726 = vpop.f32.mrb[0].mxu0
    %v1727 = vadd.f32 0.0, %v1726
    %v1728 = vpop.f32.mrb[0].mxu0
    %1729 = vmatprep.mubr.f32.mxu0 0.0
    %1730 = vmatmul.mubr.f32.gmra.mrb[0].mxu0 %v1636
    %v1731 = vpop.f32.mrb[0].mxu0
    %v1732 = vadd.f32 0.0, %v1731
    %v1733 = vpop.f32.mrb[0].mxu0
    %1734 = vmatprep.mubr.f32.mxu0 0.0
    %1735 = vmatmul.mubr.f32.gmra.mrb[0].mxu0 %v1639
    %v1736 = vpop.f32.mrb[0].mxu0
    %v1737 = vadd.f32 0.0, %v1736
    %v1738 = vpop.f32.mrb[0].mxu0
    %1739 = vmatprep.mubr.f32.mxu0 0.0
    %1740 = vmatmul.mubr.f32.gmra.mrb[0].mxu0 %v1642
    %v1741 = vpop.f32.mrb[0].mxu0
    %v1742 = vadd.f32 0.0, %v1741
    %v1743 = vpop.f32.mrb[0].mxu0
    %1744 = vmatprep.mubr.f32.mxu0 0.0
    %1745 = vmatmul.mubr.f32.gmra.mrb[0].mxu0 %v1645
    %v1746 = vpop.f32.mrb[0].mxu0
    %v1747 = vadd.f32 0.0, %v1746
    %v1748 = vpop.f32.mrb[0].mxu0
    %1749 = vmatprep.mubr.f32.mxu0 0.0
    %1750 = vmatmul.mubr.f32.gmra.mrb[0].mxu0 %v1648
    %v1751 = vpop.f32.mrb[0].mxu0
    %v1752 = vadd.f32 0.0, %v1751
    %v1753 = vpop.f32.mrb[0].mxu0
    %1754 = vdwg.mxu0
    %1755 = vmatprep.subr.mxu0 0.0
    %1756 = vmatpush1.msra.mxu0 %v107
    %1757 = vmatprep.subr.mxu0 0.0
    %1758 = vmatpush1.msra.mxu0 %v108
    %1759 = vmatprep.subr.mxu0 0.0
    %1760 = vmatpush1.msra.mxu0 %v109
    %1761 = vmatprep.subr.mxu0 0.0
    %1762 = vmatpush1.msra.mxu0 %v110
    %1763 = vmatprep.subr.mxu0 0.0
    %1764 = vmatpush1.msra.mxu0 %v111
    %1765 = vmatprep.subr.mxu0 0.0
    %1766 = vmatpush1.msra.mxu0 %v112
    %1767 = vmatprep.subr.mxu0 0.0
    %1768 = vmatpush1.msra.mxu0 %v369
    %1769 = vmatprep.subr.mxu0 0.0
    %1770 = vmatpush1.msra.mxu0 0.0
    %1771 = vmatprep.subr.mxu0 0.0
    %1772 = vmatpush1.msra.mxu0 0.0
    %1773 = vmatprep.subr.mxu0 0.0
    %1774 = vmatpush1.msra.mxu0 0.0
    %1775 = vmatprep.subr.mxu0 0.0
    %1776 = vmatpush1.msra.mxu0 0.0
    %1777 = vmatprep.subr.mxu0 0.0
    %1778 = vmatpush1.msra.mxu0 0.0
    %1779 = vmatprep.subr.mxu0 0.0
    %1780 = vmatpush1.msra.mxu0 0.0
    %1781 = vmatprep.subr.mxu0 0.0
    %1782 = vmatpush1.msra.mxu0 0.0
    %1783 = vmatprep.subr.mxu0 0.0
    %1784 = vmatpush1.msra.mxu0 0.0
    %1785 = vmatprep.subr.mxu0 0.0
    %1786 = vmatpush1.msra.mxu0 0.0
    %1787 = vmatprep.subr.mxu0 0.0
    %1788 = vmatpush1.msra.mxu0 0.0
    %1789 = vmatprep.subr.mxu0 0.0
    %1790 = vmatpush1.msra.mxu0 0.0
    %1791 = vmatprep.subr.mxu0 0.0
    %1792 = vmatpush1.msra.mxu0 0.0
    %1793 = vmatprep.subr.mxu0 0.0
    %1794 = vmatpush1.msra.mxu0 0.0
    %1795 = vmatprep.subr.mxu0 0.0
    %1796 = vmatpush1.msra.mxu0 0.0
    %1797 = vmatprep.subr.mxu0 0.0
    %1798 = vmatpush1.msra.mxu0 0.0
    %1799 = vmatprep.subr.mxu0 0.0
    %1800 = vmatpush1.msra.mxu0 0.0
    %1801 = vmatprep.subr.mxu0 0.0
    %1802 = vmatpush1.msra.mxu0 0.0
    %1803 = vmatprep.subr.mxu0 0.0
    %1804 = vmatpush1.msra.mxu0 0.0
    %1805 = vmatprep.subr.mxu0 0.0
    %1806 = vmatpush1.msra.mxu0 0.0
    %1807 = vmatprep.subr.mxu0 0.0
    %1808 = vmatpush1.msra.mxu0 0.0
    %1809 = vmatprep.subr.mxu0 0.0
    %1810 = vmatpush1.msra.mxu0 0.0
    %1811 = vmatprep.subr.mxu0 0.0
    %1812 = vmatpush1.msra.mxu0 0.0
    %1813 = vmatprep.subr.mxu0 0.0
    %1814 = vmatpush1.msra.mxu0 0.0
    %1815 = vmatprep.subr.mxu0 0.0
    %1816 = vmatpush1.msra.mxu0 0.0
    %1817 = vmatprep.subr.mxu0 0.0
    %1818 = vmatpush1.msra.mxu0 0.0
    %1819 = vmatprep.mubr.f32.mxu0 0.0
    %1820 = vmatmul.mubr.f32.gmra.mrb[0].mxu0 %v1627
    %v1821 = vpop.f32.mrb[0].mxu0
    %v1822 = vadd.f32 0.0, %v1821
    %v1823 = vpop.f32.mrb[0].mxu0
    %1824 = vmatprep.mubr.f32.mxu0 0.0
    %1825 = vmatmul.mubr.f32.gmra.mrb[0].mxu0 %v1630
    %v1826 = vpop.f32.mrb[0].mxu0
    %v1827 = vadd.f32 0.0, %v1826
    %v1828 = vpop.f32.mrb[0].mxu0
    %1829 = vmatprep.mubr.f32.mxu0 0.0
    %1830 = vmatmul.mubr.f32.gmra.mrb[0].mxu0 %v1633
    %v1831 = vpop.f32.mrb[0].mxu0
    %v1832 = vadd.f32 0.0, %v1831
    %v1833 = vpop.f32.mrb[0].mxu0
    %1834 = vmatprep.mubr.f32.mxu0 0.0
    %1835 = vmatmul.mubr.f32.gmra.mrb[0].mxu0 %v1636
    %v1836 = vpop.f32.mrb[0].mxu0
    %v1837 = vadd.f32 0.0, %v1836
    %v1838 = vpop.f32.mrb[0].mxu0
    %1839 = vmatprep.mubr.f32.mxu0 0.0
    %1840 = vmatmul.mubr.f32.gmra.mrb[0].mxu0 %v1639
    %v1841 = vpop.f32.mrb[0].mxu0
    %v1842 = vadd.f32 0.0, %v1841
    %v1843 = vpop.f32.mrb[0].mxu0
    %1844 = vmatprep.mubr.f32.mxu0 0.0
    %1845 = vmatmul.mubr.f32.gmra.mrb[0].mxu0 %v1642
    %v1846 = vpop.f32.mrb[0].mxu0
    %v1847 = vadd.f32 0.0, %v1846
    %v1848 = vpop.f32.mrb[0].mxu0
    %1849 = vmatprep.mubr.f32.mxu0 0.0
    %1850 = vmatmul.mubr.f32.gmra.mrb[0].mxu0 %v1645
    %v1851 = vpop.f32.mrb[0].mxu0
    %v1852 = vadd.f32 0.0, %v1851
    %v1853 = vpop.f32.mrb[0].mxu0
    %1854 = vmatprep.mubr.f32.mxu0 0.0
    %1855 = vmatmul.mubr.f32.gmra.mrb[0].mxu0 %v1648
    %v1856 = vpop.f32.mrb[0].mxu0
    %v1857 = vadd.f32 0.0, %v1856
    %v1858 = vpop.f32.mrb[0].mxu0
    %1859 = vdwg.mxu0
    %1860 = vmatprep.subr.mxu0 0.0
    %1861 = vmatpush1.msra.mxu0 %v115
    %1862 = vmatprep.subr.mxu0 0.0
    %1863 = vmatpush1.msra.mxu0 %v116
    %1864 = vmatprep.subr.mxu0 0.0
    %1865 = vmatpush1.msra.mxu0 %v117
    %1866 = vmatprep.subr.mxu0 0.0
    %1867 = vmatpush1.msra.mxu0 %v118
    %1868 = vmatprep.subr.mxu0 0.0
    %1869 = vmatpush1.msra.mxu0 %v119
    %1870 = vmatprep.subr.mxu0 0.0
    %1871 = vmatpush1.msra.mxu0 %v120
    %1872 = vmatprep.subr.mxu0 0.0
    %1873 = vmatpush1.msra.mxu0 %v457
    %1874 = vmatprep.subr.mxu0 0.0
    %1875 = vmatpush1.msra.mxu0 0.0
    %1876 = vmatprep.subr.mxu0 0.0
    %1877 = vmatpush1.msra.mxu0 0.0
    %1878 = vmatprep.subr.mxu0 0.0
    %1879 = vmatpush1.msra.mxu0 0.0
    %1880 = vmatprep.subr.mxu0 0.0
    %1881 = vmatpush1.msra.mxu0 0.0
    %1882 = vmatprep.subr.mxu0 0.0
    %1883 = vmatpush1.msra.mxu0 0.0
    %1884 = vmatprep.subr.mxu0 0.0
    %1885 = vmatpush1.msra.mxu0 0.0
    %1886 = vmatprep.subr.mxu0 0.0
    %1887 = vmatpush1.msra.mxu0 0.0
    %1888 = vmatprep.subr.mxu0 0.0
    %1889 = vmatpush1.msra.mxu0 0.0
    %1890 = vmatprep.subr.mxu0 0.0
    %1891 = vmatpush1.msra.mxu0 0.0
    %1892 = vmatprep.subr.mxu0 0.0
    %1893 = vmatpush1.msra.mxu0 0.0
    %1894 = vmatprep.subr.mxu0 0.0
    %1895 = vmatpush1.msra.mxu0 0.0
    %1896 = vmatprep.subr.mxu0 0.0
    %1897 = vmatpush1.msra.mxu0 0.0
    %1898 = vmatprep.subr.mxu0 0.0
    %1899 = vmatpush1.msra.mxu0 0.0
    %1900 = vmatprep.subr.mxu0 0.0
    %1901 = vmatpush1.msra.mxu0 0.0
    %1902 = vmatprep.subr.mxu0 0.0
    %1903 = vmatpush1.msra.mxu0 0.0
    %1904 = vmatprep.subr.mxu0 0.0
    %1905 = vmatpush1.msra.mxu0 0.0
    %1906 = vmatprep.subr.mxu0 0.0
    %1907 = vmatpush1.msra.mxu0 0.0
    %1908 = vmatprep.subr.mxu0 0.0
    %1909 = vmatpush1.msra.mxu0 0.0
    %1910 = vmatprep.subr.mxu0 0.0
    %1911 = vmatpush1.msra.mxu0 0.0
    %1912 = vmatprep.subr.mxu0 0.0
    %1913 = vmatpush1.msra.mxu0 0.0
    %1914 = vmatprep.subr.mxu0 0.0
    %1915 = vmatpush1.msra.mxu0 0.0
    %1916 = vmatprep.subr.mxu0 0.0
    %1917 = vmatpush1.msra.mxu0 0.0
    %1918 = vmatprep.subr.mxu0 0.0
    %1919 = vmatpush1.msra.mxu0 0.0
    %1920 = vmatprep.subr.mxu0 0.0
    %1921 = vmatpush1.msra.mxu0 0.0
    %1922 = vmatprep.subr.mxu0 0.0
    %1923 = vmatpush1.msra.mxu0 0.0
    %1924 = vmatprep.mubr.f32.mxu0 0.0
    %1925 = vmatmul.mubr.f32.gmra.mrb[0].mxu0 %v1627
    %v1926 = vpop.f32.mrb[0].mxu0
    %v1927 = vadd.f32 0.0, %v1926
    %v1928 = vpop.f32.mrb[0].mxu0
    %1929 = vmatprep.mubr.f32.mxu0 0.0
    %1930 = vmatmul.mubr.f32.gmra.mrb[0].mxu0 %v1630
    %v1931 = vpop.f32.mrb[0].mxu0
    %v1932 = vadd.f32 0.0, %v1931
    %v1933 = vpop.f32.mrb[0].mxu0
    %1934 = vmatprep.mubr.f32.mxu0 0.0
    %1935 = vmatmul.mubr.f32.gmra.mrb[0].mxu0 %v1633
    %v1936 = vpop.f32.mrb[0].mxu0
    %v1937 = vadd.f32 0.0, %v1936
    %v1938 = vpop.f32.mrb[0].mxu0
    %1939 = vmatprep.mubr.f32.mxu0 0.0
    %1940 = vmatmul.mubr.f32.gmra.mrb[0].mxu0 %v1636
    %v1941 = vpop.f32.mrb[0].mxu0
    %v1942 = vadd.f32 0.0, %v1941
    %v1943 = vpop.f32.mrb[0].mxu0
    %1944 = vmatprep.mubr.f32.mxu0 0.0
    %1945 = vmatmul.mubr.f32.gmra.mrb[0].mxu0 %v1639
    %v1946 = vpop.f32.mrb[0].mxu0
    %v1947 = vadd.f32 0.0, %v1946
    %v1948 = vpop.f32.mrb[0].mxu0
    %1949 = vmatprep.mubr.f32.mxu0 0.0
    %1950 = vmatmul.mubr.f32.gmra.mrb[0].mxu0 %v1642
    %v1951 = vpop.f32.mrb[0].mxu0
    %v1952 = vadd.f32 0.0, %v1951
    %v1953 = vpop.f32.mrb[0].mxu0
    %1954 = vmatprep.mubr.f32.mxu0 0.0
    %1955 = vmatmul.mubr.f32.gmra.mrb[0].mxu0 %v1645
    %v1956 = vpop.f32.mrb[0].mxu0
    %v1957 = vadd.f32 0.0, %v1956
    %v1958 = vpop.f32.mrb[0].mxu0
    %1959 = vmatprep.mubr.f32.mxu0 0.0
    %1960 = vmatmul.mubr.f32.gmra.mrb[0].mxu0 %v1648
    %v1961 = vpop.f32.mrb[0].mxu0
    %v1962 = vadd.f32 0.0, %v1961
    %v1963 = vpop.f32.mrb[0].mxu0
    %1964 = vdwg.mxu0
    %1965 = vmatprep.subr.mxu0 0.0
    %1966 = vmatpush1.msra.mxu0 %v1618
    %1967 = vmatprep.subr.mxu0 0.0
    %1968 = vmatpush1.msra.mxu0 %v1619
    %1969 = vmatprep.subr.mxu0 0.0
    %1970 = vmatpush1.msra.mxu0 %v1620
    %1971 = vmatprep.subr.mxu0 0.0
    %1972 = vmatpush1.msra.mxu0 %v1621
    %1973 = vmatprep.subr.mxu0 0.0
    %1974 = vmatpush1.msra.mxu0 %v1622
    %1975 = vmatprep.subr.mxu0 0.0
    %1976 = vmatpush1.msra.mxu0 %v1623
    %1977 = vmatprep.subr.mxu0 0.0
    %1978 = vmatpush1.msra.mxu0 %v1624
    %1979 = vmatprep.subr.mxu0 0.0
    %1980 = vmatpush1.msra.mxu0 %v1625
    %1981 = vmatprep.subr.mxu0 0.0
    %1982 = vmatpush1.msra.mxu0 %v1717
    %1983 = vmatprep.subr.mxu0 0.0
    %1984 = vmatpush1.msra.mxu0 %v1722
    %1985 = vmatprep.subr.mxu0 0.0
    %1986 = vmatpush1.msra.mxu0 %v1727
    %1987 = vmatprep.subr.mxu0 0.0
    %1988 = vmatpush1.msra.mxu0 %v1732
    %1989 = vmatprep.subr.mxu0 0.0
    %1990 = vmatpush1.msra.mxu0 %v1737
    %1991 = vmatprep.subr.mxu0 0.0
    %1992 = vmatpush1.msra.mxu0 %v1742
    %1993 = vmatprep.subr.mxu0 0.0
    %1994 = vmatpush1.msra.mxu0 %v1747
    %1995 = vmatprep.subr.mxu0 0.0
    %1996 = vmatpush1.msra.mxu0 %v1752
    %1997 = vmatprep.subr.mxu0 0.0
    %1998 = vmatpush1.msra.mxu0 %v1822
    %1999 = vmatprep.subr.mxu0 0.0
    %2000 = vmatpush1.msra.mxu0 %v1827
    %2001 = vmatprep.subr.mxu0 0.0
    %2002 = vmatpush1.msra.mxu0 %v1832
    %2003 = vmatprep.subr.mxu0 0.0
    %2004 = vmatpush1.msra.mxu0 %v1837
    %2005 = vmatprep.subr.mxu0 0.0
    %2006 = vmatpush1.msra.mxu0 %v1842
    %2007 = vmatprep.subr.mxu0 0.0
    %2008 = vmatpush1.msra.mxu0 %v1847
    %2009 = vmatprep.subr.mxu0 0.0
    %2010 = vmatpush1.msra.mxu0 %v1852
    %2011 = vmatprep.subr.mxu0 0.0
    %2012 = vmatpush1.msra.mxu0 %v1857
    %2013 = vmatprep.subr.mxu0 0.0
    %2014 = vmatpush1.msra.mxu0 %v1927
    %2015 = vmatprep.subr.mxu0 0.0
    %2016 = vmatpush1.msra.mxu0 %v1932
    %2017 = vmatprep.subr.mxu0 0.0
    %2018 = vmatpush1.msra.mxu0 %v1937
    %2019 = vmatprep.subr.mxu0 0.0
    %2020 = vmatpush1.msra.mxu0 %v1942
    %2021 = vmatprep.subr.mxu0 0.0
    %2022 = vmatpush1.msra.mxu0 %v1947
    %2023 = vmatprep.subr.mxu0 0.0
    %2024 = vmatpush1.msra.mxu0 %v1952
    %2025 = vmatprep.subr.mxu0 0.0
    %2026 = vmatpush1.msra.mxu0 %v1957
    %2027 = vmatprep.subr.mxu0 0.0
    %2028 = vmatpush1.msra.mxu0 %v1962
    %2029 = vmatprep.mubr.f32.mxu0 %v139
    %2030 = vmatmul.mubr.f32.gmra.mrb[0].mxu0 %v138
    %v2031 = vpop.f32.mrb[0].mxu0
    %v2032 = vadd.f32 %v1043, %v2031
    %v2033 = vpop.f32.mrb[0].mxu0
    %2034 = vmatprep.mubr.f32.mxu0 %v141
    %2035 = vmatmul.mubr.f32.gmra.mrb[0].mxu0 %v140
    %v2036 = vpop.f32.mrb[0].mxu0
    %v2037 = vadd.f32 %v1043, %v2036
    %v2038 = vpop.f32.mrb[0].mxu0
    %2039 = vdwg.mxu0
    %v2040 = vxor.u32 %v2032, 2147483648
    %v2041 = vxor.u32 %v2037, 2147483648
    %v2042 = vmul.f32 %v2040, 1.442695
    %v2043 = vpow.pop %v2042
    %v2044 = vmul.f32 %v2041, 1.442695
    %v2045 = vpow.pop %v2044
    %v2046 = vadd.f32 %v2043, 1.0
    %v2047 = vadd.f32 %v2045, 1.0
    %v2048 = vrcp.pop %v2046
    %v2049 = vmul.f32 1.0, %v2048
    %v2050 = vrcp.pop %v2047
    %v2051 = vmul.f32 1.0, %v2050
    %s2052 = scalar_lea.vmem %s8, 16
    %2053 = vst.msk [vmem:[%s2052] sm:$0xff] %vm266, %v2049
    %2054 = vst.msk [vmem:[%s2052 + $0x8] sm:$0xff] %vm266, %v2051
    // Predicated region
    $region54: #{decoder_forward.1} parent=1 // pred_check
      _
    $region55: #{decoder_forward.1} parent=1 // pred_check_branch
      %2056 = sbr.rel (0) target = $region57
    $region56: #{decoder_forward.1} parent=1 // pred_region
      _
    $region57: #{decoder_forward.1} parent=1 // pred_fallthru
      _
    // Predicated region
    $region58: #{decoder_forward.1} parent=1 // pred_check
      _
    $region59: #{decoder_forward.1} parent=1 // pred_check_branch
      %2058 = sbr.rel (0) target = $region61
    $region60: #{decoder_forward.1} parent=1 // pred_region
      _
    $region61: #{decoder_forward.1} parent=1 // pred_fallthru
      _
    %2059 = vsyncpa [#allocation4], 1
    %2060 = vsyncpa [#allocation8], 1
    %2061 = vsyncpa [#allocation11], 1
    %2062 = vsyncpa [#allocation5], 1

</llo_original>
